<compile_context>
chip_gen: v7x
topology: tpu7x:2x2x1
jax: 0.10.0
libtpu: 0.0.40
codegen_flags: <defaults>
</compile_context>

<pallas_src>
import functools

import numpy as np
import jax
import jax.numpy as jnp
from jax import lax
from jax.experimental import pallas as pl
from jax.experimental.pallas import tpu as pltpu

EPS = 1e-5


def _resblock_kernel(xpad_ref, wb1_ref, wb2_ref, gb_ref, out_ref, pad2_ref,
                     *, N, H, RP, W, C):
    """
    xpad_ref : (N*RP + 8, W*C) f32   row-padded activations: per image n,
                                     row n*RP is a zero row, rows n*RP+1..n*RP+H
                                     are data rows, the rest (and the +8 tail)
                                     are zero.  RP is a multiple of 8.
    wb*_ref  : (3*W*C, W*C)   bf16   K-stacked block-banded conv weights
                                     (rows ordered dy=0,1,2).
    gb_ref   : (4, W*C)       f32    lane-tiled [gamma1; beta1; gamma2; beta2].
    out_ref  : (N*RP, W*C)    f32    conv-output-row layout; row n*RP+h holds
                                     output (n, h); other rows are junk and are
                                     sliced away by the wrapper.
    pad2_ref : (N*RP+16, W*C) f32    scratch for the re-padded conv2 input.
    """
    WC = W * C
    NP = N * RP
    inv_cnt = 1.0 / float(N * H * W)

    # Valid conv-output rows: row j holds output (n, h) with j = n*RP + h.
    row = lax.broadcasted_iota(jnp.int32, (NP, 1), 0)
    mask = ((row % RP) < H).astype(jnp.float32)                     # (NP, 1)

    # Constant per-channel fold+spread+average matrix:
    #   avg[i, j] = 1/(N*H*W) if (i % C) == (j % C) else 0
    # so (1, WC) lane sums @ avg -> per-channel batch mean, already broadcast
    # back to every (w, c) lane.  Built once on the VPU, used by both BNs.
    ii = lax.broadcasted_iota(jnp.int32, (WC, WC), 0)
    jj = lax.broadcasted_iota(jnp.int32, (WC, WC), 1)
    avg = jnp.where((ii % C) == (jj % C), inv_cnt, 0.0)             # (WC, WC)

    def conv(t0, t1, t2, wb_ref):
        # One K-stacked MXU matmul per conv: (NP, 3*WC) @ (3*WC, WC),
        # bf16 operands, f32 accumulation (band accumulation stays in the MXU).
        lhs = jnp.concatenate([t0, t1, t2], axis=1).astype(wb_ref.dtype)
        return jnp.dot(lhs, wb_ref[...], preferred_element_type=jnp.float32)

    def bn(h, g_t, be_t):
        # Training-mode BatchNorm over the N*H*W valid positions: single-pass
        # sums (junk rows masked), biased variance, eps=1e-5, folded into one
        # per-lane scale/shift.
        hm = h * mask
        mean_t = jnp.dot(jnp.sum(hm, axis=0, keepdims=True), avg,
                         preferred_element_type=jnp.float32)        # (1, WC)
        ex2_t = jnp.dot(jnp.sum(hm * h, axis=0, keepdims=True), avg,
                        preferred_element_type=jnp.float32)         # (1, WC)
        var_t = ex2_t - mean_t * mean_t
        s_t = g_t * lax.rsqrt(var_t + EPS)
        b_t = be_t - mean_t * s_t
        return h * s_t + b_t                                        # (NP, WC)

    # ---- conv1: taps read straight from the over-padded input --------------
    x0 = xpad_ref[0:NP, :]           # rows j+0  (row above)
    x1 = xpad_ref[1:1 + NP, :]       # rows j+1  (centre tap == residual rows)
    x2 = xpad_ref[2:2 + NP, :]       # rows j+2  (row below; +8 zero tail keeps
                                     #            this slice in bounds)
    h1 = conv(x0, x1, x2, wb1_ref)
    a1 = jnp.maximum(bn(h1, gb_ref[0:1, :], gb_ref[1:2, :]), 0.0) * mask

    # ---- re-pad a1 for conv2 (aligned 8-row stores only) --------------------
    zblk = jnp.zeros((8, WC), jnp.float32)
    pad2_ref[0:8, :] = zblk                      # head zeros (row above n=0)
    pad2_ref[8 + NP:16 + NP, :] = zblk           # tail zeros
    pad2_ref[8:8 + NP, :] = a1                   # masked junk rows are the
                                                 # zero borders between images
    q0 = pad2_ref[7:7 + NP, :]                   # rows j-1 of a1 (zero-padded)
    q2 = pad2_ref[9:9 + NP, :]                   # rows j+1 of a1 (zero-padded)
    h2 = bn(conv(q0, a1, q2, wb2_ref), gb_ref[2:3, :], gb_ref[3:4, :])

    # ---- residual add + ReLU: one full-width aligned store ------------------
    out_ref[...] = jnp.maximum(h2 + x1, 0.0)


def _band_weights(w_oihw, board_w, dtype):
    """PyTorch (Cout, Cin, 3, 3) -> K-stacked (3*W*C, W*C) block-banded matrix.

    band[dy*W*C + wi*C + ci, wo*C + co] = w[co, ci, dy, wi-wo+1] inside the
    width band (|wi-wo| <= 1), zero outside, so a 3x3 'SAME' conv becomes one
    matmul on (w, c)-flattened lanes per dy, K-stacked over dy.
    Host-side, run once per weight set (kept out of the per-step jit).
    """
    w = np.asarray(w_oihw, dtype=np.float32)          # (Cout, Cin, 3, 3)
    C = w.shape[0]
    Wd = board_w
    wk = np.transpose(w, (2, 3, 1, 0))                # (ky, kx, ci, co)
    band = np.zeros((3, Wd, C, Wd, C), np.float32)    # (dy, wi, ci, wo, co)
    for dy in range(3):
        for dx in range(3):
            for wo in range(Wd):
                wi = wo + dx - 1
                if 0 <= wi < Wd:
                    band[dy, wi, :, wo, :] = wk[dy, dx]
    return jnp.asarray(band.reshape(3 * Wd * C, Wd * C), dtype=dtype)


def prepare_resblock_params(w1, cb1, g1, be1, w2, cb2, g2, be2, *, board_w,
                            weight_dtype=jnp.bfloat16):
    """One-time parameter prep (weights are static at inference): bf16 banded
    conv weights and lane-tiled, packed BN affine parameters."""
    del cb1, cb2  # cancelled exactly by training-mode BN mean subtraction
    wb1 = _band_weights(w1, board_w, weight_dtype)
    wb2 = _band_weights(w2, board_w, weight_dtype)
    gb = jnp.stack([jnp.tile(g1.astype(jnp.float32), board_w),
                    jnp.tile(be1.astype(jnp.float32), board_w),
                    jnp.tile(g2.astype(jnp.float32), board_w),
                    jnp.tile(be2.astype(jnp.float32), board_w)], axis=0)
    return wb1, wb2, gb


@jax.jit
def resblock_pallas(x_nchw, wb1, wb2, gb):
    """x_nchw: (N, C, H, W) float32; wb1/wb2/gb from prepare_resblock_params."""
    N, C, H, W = x_nchw.shape
    WC = W * C
    RP = -(-(H + 2) // 8) * 8          # 8-aligned padded row stride per image
    NP = N * RP

    # NCHW -> lane-dense rows (row = (n, padded h), lanes = (w, c)) with one
    # zero row above and >=1 below each image, plus an 8-row zero tail so the
    # dy=1,2 conv taps are plain in-bounds ref slices.
    x_rows = jnp.transpose(x_nchw, (0, 2, 3, 1)).reshape(N, H, WC)
    xpad = jnp.pad(x_rows, ((0, 0), (1, RP - H - 1), (0, 0))).reshape(NP, WC)
    xpad = jnp.pad(xpad, ((0, 8), (0, 0)))

    kernel = functools.partial(_resblock_kernel, N=N, H=H, RP=RP, W=W, C=C)

    itemsize_w = jnp.dtype(wb1.dtype).itemsize
    flops = 2 * (2 * NP * (3 * WC) * WC) + 4 * (2 * WC * WC)
    bytes_accessed = ((NP + 8) * WC * 4 + NP * WC * 4
                      + 2 * (3 * WC * WC) * itemsize_w + 4 * WC * 4)

    vmem = pl.BlockSpec(memory_space=pltpu.MemorySpace.VMEM)
    out2d = pl.pallas_call(
        kernel,
        out_shape=jax.ShapeDtypeStruct((NP, WC), jnp.float32),
        in_specs=[vmem, vmem, vmem, vmem],
        out_specs=vmem,
        scratch_shapes=[pltpu.VMEM((NP + 16, WC), jnp.float32)],
        cost_estimate=pl.CostEstimate(flops=flops, transcendentals=2 * WC,
                                      bytes_accessed=bytes_accessed),
    )(xpad, wb1, wb2, gb)

    out = out2d.reshape(N, RP, W, C)[:, :H]           # drop junk rows
    return jnp.transpose(out, (0, 3, 1, 2))           # -> NCHW


def resblock_ref(x, w1, cb1, g1, be1, w2, cb2, g2, be2):
    """Pure-JAX f32 reference mirroring the PyTorch forward (training-mode BN)."""
    def conv(x, w, b):
        y = lax.conv_general_dilated(x, w, (1, 1), 'SAME',
                                     dimension_numbers=('NCHW', 'OIHW', 'NCHW'))
        return y + b[None, :, None, None]

    def bn(x, g, be):
        mean = x.mean(axis=(0, 2, 3), keepdims=True)
        var = jnp.mean(jnp.square(x - mean), axis=(0, 2, 3), keepdims=True)
        return ((x - mean) * lax.rsqrt(var + EPS)
                * g[None, :, None, None] + be[None, :, None, None])

    h = jax.nn.relu(bn(conv(x, w1, cb1), g1, be1))
    h = bn(conv(h, w2, cb2), g2, be2)
    return jax.nn.relu(h + x)


if __name__ == "__main__":
    # small deterministic shapes: batch=2, num_hidden=32, 8x8 board
    N, C, H, W = 2, 32, 8, 8
    key = jax.random.PRNGKey(0)
    ks = jax.random.split(key, 9)

    x = jax.random.normal(ks[0], (N, C, H, W), jnp.float32)
    w1 = jax.random.normal(ks[1], (C, C, 3, 3), jnp.float32) * 0.1
    cb1 = jax.random.normal(ks[2], (C,), jnp.float32) * 0.1
    g1 = 1.0 + 0.1 * jax.random.normal(ks[3], (C,), jnp.float32)
    be1 = jax.random.normal(ks[4], (C,), jnp.float32) * 0.1
    w2 = jax.random.normal(ks[5], (C, C, 3, 3), jnp.float32) * 0.1
    cb2 = jax.random.normal(ks[6], (C,), jnp.float32) * 0.1
    g2 = 1.0 + 0.1 * jax.random.normal(ks[7], (C,), jnp.float32)
    be2 = jax.random.normal(ks[8], (C,), jnp.float32) * 0.1

    # One-time prep (bf16 banded weights, packed lane-tiled BN params).
    wb1, wb2, gb = prepare_resblock_params(w1, cb1, g1, be1, w2, cb2, g2, be2,
                                           board_w=W)

    out = jax.block_until_ready(resblock_pallas(x, wb1, wb2, gb))

    ref = resblock_ref(x, w1, cb1, g1, be1, w2, cb2, g2, be2)
    assert out.shape == (N, C, H, W) and out.dtype == jnp.float32
    err = jnp.max(jnp.abs(out - ref))
    # bf16 banded weights + bf16 MXU operands give ~1e-2-level deviations vs
    # the f32 reference; 2e-2 is a meaningful bound for this block.
    assert jnp.allclose(out, ref, rtol=2e-2, atol=2e-2), f"max abs err {err}"

    print("KERNEL_OK")
</pallas_src>

<mosaic_0001>
module attributes {stable_mosaic.version = 11 : i64} {
  func.func @_resblock_kernel(%arg0: memref<40x256xf32, #tpu.memory_space<vmem>>, %arg1: memref<768x256xbf16, #tpu.memory_space<vmem>>, %arg2: memref<768x256xbf16, #tpu.memory_space<vmem>>, %arg3: memref<4x256xf32, #tpu.memory_space<vmem>>, %arg4: memref<32x256xf32, #tpu.memory_space<vmem>>, %arg5: memref<48x256xf32, #tpu.memory_space<vmem>>) attributes {dimension_semantics = [], scalar_prefetch = 0 : i64, scratch_operands = 1 : i64, tpu.core_type = #tpu.core_type<tc>} {
    %0 = tpu.iota {dimensions = array<i32: 0>} : vector<32x1xi32>
    %c16_i32 = arith.constant 16 : i32
    %c0_i32 = arith.constant 0 : i32
    %1 = arith.cmpi eq, %c16_i32, %c0_i32 : i32
    %c1_i32 = arith.constant 1 : i32
    %2 = arith.select %1, %c1_i32, %c16_i32 : i32
    %3 = vector.broadcast %2 : i32 to vector<32x1xi32>
    %4 = arith.remsi %0, %3 : vector<32x1xi32>
    %c0_i32_0 = arith.constant 0 : i32
    %5 = vector.broadcast %c0_i32_0 : i32 to vector<32x1xi32>
    %6 = arith.cmpi ne, %4, %5 : vector<32x1xi32>
    %c0_i32_1 = arith.constant 0 : i32
    %7 = vector.broadcast %c0_i32_1 : i32 to vector<32x1xi32>
    %8 = arith.cmpi slt, %4, %7 : vector<32x1xi32>
    %c0_i32_2 = arith.constant 0 : i32
    %9 = arith.cmpi slt, %2, %c0_i32_2 : i32
    %10 = vector.broadcast %9 : i1 to vector<32x1xi1>
    %11 = vector.broadcast %10 : vector<32x1xi1> to vector<32x1xi1>
    %12 = arith.xori %8, %11 : vector<32x1xi1>
    %13 = arith.andi %12, %6 : vector<32x1xi1>
    %14 = vector.broadcast %2 : i32 to vector<32x1xi32>
    %15 = arith.addi %4, %14 : vector<32x1xi32>
    %16 = arith.select %13, %15, %4 : vector<32x1xi1>, vector<32x1xi32>
    %c8_i32 = arith.constant 8 : i32
    %17 = vector.broadcast %c8_i32 : i32 to vector<32x1xi32>
    %18 = arith.cmpi slt, %16, %17 : vector<32x1xi32>
    %19 = arith.extui %18 : vector<32x1xi1> to vector<32x1xi32>
    %20 = arith.sitofp %19 : vector<32x1xi32> to vector<32x1xf32>
    %21 = tpu.iota {dimensions = array<i32: 0>} : vector<256x256xi32>
    %22 = tpu.iota {dimensions = array<i32: 1>} : vector<256x256xi32>
    %c32_i32 = arith.constant 32 : i32
    %c0_i32_3 = arith.constant 0 : i32
    %23 = arith.cmpi eq, %c32_i32, %c0_i32_3 : i32
    %c1_i32_4 = arith.constant 1 : i32
    %24 = arith.select %23, %c1_i32_4, %c32_i32 : i32
    %25 = vector.broadcast %24 : i32 to vector<256x256xi32>
    %26 = arith.remsi %21, %25 : vector<256x256xi32>
    %c0_i32_5 = arith.constant 0 : i32
    %27 = vector.broadcast %c0_i32_5 : i32 to vector<256x256xi32>
    %28 = arith.cmpi ne, %26, %27 : vector<256x256xi32>
    %c0_i32_6 = arith.constant 0 : i32
    %29 = vector.broadcast %c0_i32_6 : i32 to vector<256x256xi32>
    %30 = arith.cmpi slt, %26, %29 : vector<256x256xi32>
    %c0_i32_7 = arith.constant 0 : i32
    %31 = arith.cmpi slt, %24, %c0_i32_7 : i32
    %32 = vector.broadcast %31 : i1 to vector<256x256xi1>
    %33 = vector.broadcast %32 : vector<256x256xi1> to vector<256x256xi1>
    %34 = arith.xori %30, %33 : vector<256x256xi1>
    %35 = arith.andi %34, %28 : vector<256x256xi1>
    %36 = vector.broadcast %24 : i32 to vector<256x256xi32>
    %37 = arith.addi %26, %36 : vector<256x256xi32>
    %38 = arith.select %35, %37, %26 : vector<256x256xi1>, vector<256x256xi32>
    %c32_i32_8 = arith.constant 32 : i32
    %c0_i32_9 = arith.constant 0 : i32
    %39 = arith.cmpi eq, %c32_i32_8, %c0_i32_9 : i32
    %c1_i32_10 = arith.constant 1 : i32
    %40 = arith.select %39, %c1_i32_10, %c32_i32_8 : i32
    %41 = vector.broadcast %40 : i32 to vector<256x256xi32>
    %42 = arith.remsi %22, %41 : vector<256x256xi32>
    %c0_i32_11 = arith.constant 0 : i32
    %43 = vector.broadcast %c0_i32_11 : i32 to vector<256x256xi32>
    %44 = arith.cmpi ne, %42, %43 : vector<256x256xi32>
    %c0_i32_12 = arith.constant 0 : i32
    %45 = vector.broadcast %c0_i32_12 : i32 to vector<256x256xi32>
    %46 = arith.cmpi slt, %42, %45 : vector<256x256xi32>
    %c0_i32_13 = arith.constant 0 : i32
    %47 = arith.cmpi slt, %40, %c0_i32_13 : i32
    %48 = vector.broadcast %47 : i1 to vector<256x256xi1>
    %49 = vector.broadcast %48 : vector<256x256xi1> to vector<256x256xi1>
    %50 = arith.xori %46, %49 : vector<256x256xi1>
    %51 = arith.andi %50, %44 : vector<256x256xi1>
    %52 = vector.broadcast %40 : i32 to vector<256x256xi32>
    %53 = arith.addi %42, %52 : vector<256x256xi32>
    %54 = arith.select %51, %53, %42 : vector<256x256xi1>, vector<256x256xi32>
    %55 = arith.cmpi eq, %38, %54 : vector<256x256xi32>
    %cst = arith.constant 7.812500e-03 : f32
    %cst_14 = arith.constant 0.000000e+00 : f32
    %56 = vector.broadcast %cst : f32 to vector<256x256xf32>
    %57 = vector.broadcast %cst_14 : f32 to vector<256x256xf32>
    %58 = arith.select %55, %56, %57 : vector<256x256xi1>, vector<256x256xf32>
    %c0 = arith.constant 0 : index
    %c0_15 = arith.constant 0 : index
    %59 = vector.load %arg0[%c0, %c0_15] : memref<40x256xf32, #tpu.memory_space<vmem>>, vector<32x256xf32>
    %c1 = arith.constant 1 : index
    %c0_16 = arith.constant 0 : index
    %60 = vector.load %arg0[%c1, %c0_16] : memref<40x256xf32, #tpu.memory_space<vmem>>, vector<32x256xf32>
    %c2 = arith.constant 2 : index
    %c0_17 = arith.constant 0 : index
    %61 = vector.load %arg0[%c2, %c0_17] : memref<40x256xf32, #tpu.memory_space<vmem>>, vector<32x256xf32>
    %62 = tpu.concatenate %59, %60, %61 in 1 : vector<32x256xf32>, vector<32x256xf32>, vector<32x256xf32> -> vector<32x768xf32>
    %63 = arith.truncf %62 : vector<32x768xf32> to vector<32x768xbf16>
    %c0_18 = arith.constant 0 : index
    %c0_19 = arith.constant 0 : index
    %64 = vector.load %arg1[%c0_18, %c0_19] : memref<768x256xbf16, #tpu.memory_space<vmem>>, vector<768x256xbf16>
    %cst_20 = arith.constant dense<0.000000e+00> : vector<32x256xf32>
    %65 = tpu.matmul %63, %64, %cst_20 {dimension_numbers = #tpu.dot_dimension_numbers<[1], [0], [0], [1], [0, 0, 1, 1], [], []>} : vector<32x768xbf16>, vector<768x256xbf16>, vector<32x256xf32> -> vector<32x256xf32>
    %c0_21 = arith.constant 0 : index
    %c0_22 = arith.constant 0 : index
    %66 = vector.load %arg3[%c0_21, %c0_22] : memref<4x256xf32, #tpu.memory_space<vmem>>, vector<1x256xf32>
    %c1_23 = arith.constant 1 : index
    %c0_24 = arith.constant 0 : index
    %67 = vector.load %arg3[%c1_23, %c0_24] : memref<4x256xf32, #tpu.memory_space<vmem>>, vector<1x256xf32>
    %68 = vector.broadcast %20 : vector<32x1xf32> to vector<32x256xf32>
    %69 = arith.mulf %65, %68 : vector<32x256xf32>
    %cst_25 = arith.constant dense<0.000000e+00> : vector<256xf32>
    %70 = vector.multi_reduction <add>, %69, %cst_25 [0] : vector<32x256xf32> to vector<256xf32>
    %71 = vector.shape_cast %70 : vector<256xf32> to vector<1x256xf32>
    %cst_26 = arith.constant dense<0.000000e+00> : vector<1x256xf32>
    %72 = tpu.matmul %71, %58, %cst_26 {dimension_numbers = #tpu.dot_dimension_numbers<[1], [0], [0], [1], [0, 0, 1, 1], [], []>} : vector<1x256xf32>, vector<256x256xf32>, vector<1x256xf32> -> vector<1x256xf32>
    %73 = arith.mulf %69, %65 : vector<32x256xf32>
    %cst_27 = arith.constant dense<0.000000e+00> : vector<256xf32>
    %74 = vector.multi_reduction <add>, %73, %cst_27 [0] : vector<32x256xf32> to vector<256xf32>
    %75 = vector.shape_cast %74 : vector<256xf32> to vector<1x256xf32>
    %cst_28 = arith.constant dense<0.000000e+00> : vector<1x256xf32>
    %76 = tpu.matmul %75, %58, %cst_28 {dimension_numbers = #tpu.dot_dimension_numbers<[1], [0], [0], [1], [0, 0, 1, 1], [], []>} : vector<1x256xf32>, vector<256x256xf32>, vector<1x256xf32> -> vector<1x256xf32>
    %77 = arith.mulf %72, %72 : vector<1x256xf32>
    %78 = arith.subf %76, %77 : vector<1x256xf32>
    %cst_29 = arith.constant 9.99999974E-6 : f32
    %79 = vector.broadcast %cst_29 : f32 to vector<1x256xf32>
    %80 = arith.addf %78, %79 : vector<1x256xf32>
    %81 = math.rsqrt %80 : vector<1x256xf32>
    %82 = arith.mulf %66, %81 : vector<1x256xf32>
    %83 = arith.mulf %72, %82 : vector<1x256xf32>
    %84 = arith.subf %67, %83 : vector<1x256xf32>
    %85 = vector.broadcast %82 : vector<1x256xf32> to vector<32x256xf32>
    %86 = arith.mulf %65, %85 : vector<32x256xf32>
    %87 = vector.broadcast %84 : vector<1x256xf32> to vector<32x256xf32>
    %88 = arith.addf %86, %87 : vector<32x256xf32>
    %cst_30 = arith.constant 0.000000e+00 : f32
    %89 = vector.broadcast %cst_30 : f32 to vector<32x256xf32>
    %90 = arith.maximumf %88, %89 : vector<32x256xf32>
    %91 = vector.broadcast %20 : vector<32x1xf32> to vector<32x256xf32>
    %92 = arith.mulf %90, %91 : vector<32x256xf32>
    %cst_31 = arith.constant 0.000000e+00 : f32
    %93 = vector.broadcast %cst_31 : f32 to vector<8x256xf32>
    %c0_32 = arith.constant 0 : index
    %c0_33 = arith.constant 0 : index
    %94 = vector.load %arg5[%c0_32, %c0_33] : memref<48x256xf32, #tpu.memory_space<vmem>>, vector<8x256xf32>
    tpu.vector_store %arg5[%c0_32, %c0_33], %93 {strides = array<i32>} : memref<48x256xf32, #tpu.memory_space<vmem>>, vector<8x256xf32>,
    %c40 = arith.constant 40 : index
    %c0_34 = arith.constant 0 : index
    %95 = vector.load %arg5[%c40, %c0_34] : memref<48x256xf32, #tpu.memory_space<vmem>>, vector<8x256xf32>
    tpu.vector_store %arg5[%c40, %c0_34], %93 {strides = array<i32>} : memref<48x256xf32, #tpu.memory_space<vmem>>, vector<8x256xf32>,
    %c8 = arith.constant 8 : index
    %c0_35 = arith.constant 0 : index
    %96 = vector.load %arg5[%c8, %c0_35] : memref<48x256xf32, #tpu.memory_space<vmem>>, vector<32x256xf32>
    tpu.vector_store %arg5[%c8, %c0_35], %92 {strides = array<i32>} : memref<48x256xf32, #tpu.memory_space<vmem>>, vector<32x256xf32>,
    %c7 = arith.constant 7 : index
    %c0_36 = arith.constant 0 : index
    %97 = vector.load %arg5[%c7, %c0_36] : memref<48x256xf32, #tpu.memory_space<vmem>>, vector<32x256xf32>
    %c9 = arith.constant 9 : index
    %c0_37 = arith.constant 0 : index
    %98 = vector.load %arg5[%c9, %c0_37] : memref<48x256xf32, #tpu.memory_space<vmem>>, vector<32x256xf32>
    %99 = tpu.concatenate %97, %92, %98 in 1 : vector<32x256xf32>, vector<32x256xf32>, vector<32x256xf32> -> vector<32x768xf32>
    %100 = arith.truncf %99 : vector<32x768xf32> to vector<32x768xbf16>
    %c0_38 = arith.constant 0 : index
    %c0_39 = arith.constant 0 : index
    %101 = vector.load %arg2[%c0_38, %c0_39] : memref<768x256xbf16, #tpu.memory_space<vmem>>, vector<768x256xbf16>
    %cst_40 = arith.constant dense<0.000000e+00> : vector<32x256xf32>
    %102 = tpu.matmul %100, %101, %cst_40 {dimension_numbers = #tpu.dot_dimension_numbers<[1], [0], [0], [1], [0, 0, 1, 1], [], []>} : vector<32x768xbf16>, vector<768x256xbf16>, vector<32x256xf32> -> vector<32x256xf32>
    %c2_41 = arith.constant 2 : index
    %c0_42 = arith.constant 0 : index
    %103 = vector.load %arg3[%c2_41, %c0_42] : memref<4x256xf32, #tpu.memory_space<vmem>>, vector<1x256xf32>
    %c3 = arith.constant 3 : index
    %c0_43 = arith.constant 0 : index
    %104 = vector.load %arg3[%c3, %c0_43] : memref<4x256xf32, #tpu.memory_space<vmem>>, vector<1x256xf32>
    %105 = vector.broadcast %20 : vector<32x1xf32> to vector<32x256xf32>
    %106 = arith.mulf %102, %105 : vector<32x256xf32>
    %cst_44 = arith.constant dense<0.000000e+00> : vector<256xf32>
    %107 = vector.multi_reduction <add>, %106, %cst_44 [0] : vector<32x256xf32> to vector<256xf32>
    %108 = vector.shape_cast %107 : vector<256xf32> to vector<1x256xf32>
    %cst_45 = arith.constant dense<0.000000e+00> : vector<1x256xf32>
    %109 = tpu.matmul %108, %58, %cst_45 {dimension_numbers = #tpu.dot_dimension_numbers<[1], [0], [0], [1], [0, 0, 1, 1], [], []>} : vector<1x256xf32>, vector<256x256xf32>, vector<1x256xf32> -> vector<1x256xf32>
    %110 = arith.mulf %106, %102 : vector<32x256xf32>
    %cst_46 = arith.constant dense<0.000000e+00> : vector<256xf32>
    %111 = vector.multi_reduction <add>, %110, %cst_46 [0] : vector<32x256xf32> to vector<256xf32>
    %112 = vector.shape_cast %111 : vector<256xf32> to vector<1x256xf32>
    %cst_47 = arith.constant dense<0.000000e+00> : vector<1x256xf32>
    %113 = tpu.matmul %112, %58, %cst_47 {dimension_numbers = #tpu.dot_dimension_numbers<[1], [0], [0], [1], [0, 0, 1, 1], [], []>} : vector<1x256xf32>, vector<256x256xf32>, vector<1x256xf32> -> vector<1x256xf32>
    %114 = arith.mulf %109, %109 : vector<1x256xf32>
    %115 = arith.subf %113, %114 : vector<1x256xf32>
    %cst_48 = arith.constant 9.99999974E-6 : f32
    %116 = vector.broadcast %cst_48 : f32 to vector<1x256xf32>
    %117 = arith.addf %115, %116 : vector<1x256xf32>
    %118 = math.rsqrt %117 : vector<1x256xf32>
    %119 = arith.mulf %103, %118 : vector<1x256xf32>
    %120 = arith.mulf %109, %119 : vector<1x256xf32>
    %121 = arith.subf %104, %120 : vector<1x256xf32>
    %122 = vector.broadcast %119 : vector<1x256xf32> to vector<32x256xf32>
    %123 = arith.mulf %102, %122 : vector<32x256xf32>
    %124 = vector.broadcast %121 : vector<1x256xf32> to vector<32x256xf32>
    %125 = arith.addf %123, %124 : vector<32x256xf32>
    %126 = arith.addf %125, %60 : vector<32x256xf32>
    %cst_49 = arith.constant 0.000000e+00 : f32
    %127 = vector.broadcast %cst_49 : f32 to vector<32x256xf32>
    %128 = arith.maximumf %126, %127 : vector<32x256xf32>
    %c0_50 = arith.constant 0 : index
    %c0_51 = arith.constant 0 : index
    %129 = vector.load %arg4[%c0_50, %c0_51] : memref<32x256xf32, #tpu.memory_space<vmem>>, vector<32x256xf32>
    tpu.vector_store %arg4[%c0_50, %c0_51], %128 {strides = array<i32>} : memref<32x256xf32, #tpu.memory_space<vmem>>, vector<32x256xf32>,
    return
  }
}

</mosaic_0001>

<llo_original>
// kernel: resblock_pallas.1
$region0: #{resblock_pallas.1}
  #allocation0 [shape = 'u32[]', space=smem, size = 0x4, offset = 0x4, fixed_abs, tag = 'smem constant byte address 0x4 - core index']
  #allocation1 [shape = 'u32[144,128]{1,0:T(1,128)}', space=vmem, size = 0x12000, scoped, tag = 'internal scratch']
  #allocation2 [shape = 'f32[48,256]{1,0:T(8,128)}', space=vmem, size = 0xc000, scoped, tag = 'scratch operand']
  %s0 = inlined_call_operand.vmem [shape: f32[40,256], index: 0, kind: input, shape index: {}]
  %s1 = inlined_call_operand.hbm [shape: bf16[768,256], index: 1, kind: input, shape index: {}]
  %s2 = inlined_call_operand.hbm [shape: bf16[768,256], index: 2, kind: input, shape index: {}]
  %s3 = inlined_call_operand.vmem [shape: f32[4,256], index: 3, kind: input, shape index: {}]
  %s4 = inlined_call_operand.vmem [shape: f32[32,256], index: 4, kind: output, shape index: {}]
  %s5 = sld [smem:[#allocation0]]
  $region34: #{resblock_pallas.1} parent=0
    _
  %s7 = ssub.s32 1, %s5
  %s8 = scalar_select 0, %s7, %s5
  $region1: #{resblock_pallas.1} parent=0
    #allocation3 [shape = 'u8[393216]{0}', space=vmem, size = 0x60000, scoped, tag = 'input window, operand 1, single buffered']
    #allocation4 [shape = 's32[1]{0}', space=sflag, size = 0x4, scoped, tag = 'scoped memory for resblock_pallas.1']
    #allocation5 [shape = 'u8[393216]{0}', space=vmem, size = 0x60000, scoped, tag = 'input window, operand 2, single buffered']
    #allocation6 [shape = 's32[1]{0}', space=sflag, size = 0x4, scoped, tag = 'scoped memory for resblock_pallas.1']
    %9 = vsyncpa [#allocation4], 0
    %10 = vsyncpa [#allocation6], 0
    // Predicated region
    $region2: #{resblock_pallas.1} parent=1 // pred_check
      _
    $region3: #{resblock_pallas.1} parent=1 // pred_check_branch
      %12 = sbr.rel (0) target = $region5
    $region4: #{resblock_pallas.1} parent=1 // pred_region
      _
    $region5: #{resblock_pallas.1} parent=1 // pred_fallthru
      _
    // Predicated region
    $region6: #{resblock_pallas.1} parent=1 // pred_check
      _
    $region7: #{resblock_pallas.1} parent=1 // pred_check_branch
      %14 = sbr.rel (0) target = $region9
    $region8: #{resblock_pallas.1} parent=1 // pred_region
      %s16 = ssub.s32 12288, 12288
      %17 = vsyncadd [#allocation4], %s16
      %s18 = sshll.u32 [#allocation3], 4
      %s19 = int_to_ptr.vmem [resolvable:$true] %s18
      %24 = dma.hbm_to_vmem [thread:$0]  %s1, 12288, %s19, [#allocation4], 128, 128, 8
    $region9: #{resblock_pallas.1} parent=1 // pred_fallthru
      _
    // Predicated region
    $region10: #{resblock_pallas.1} parent=1 // pred_check
      _
    $region11: #{resblock_pallas.1} parent=1 // pred_check_branch
      %26 = sbr.rel (0) target = $region13
    $region12: #{resblock_pallas.1} parent=1 // pred_region
      %s28 = ssub.s32 12288, 12288
      %29 = vsyncadd [#allocation6], %s28
      %s30 = sshll.u32 [#allocation5], 4
      %s31 = int_to_ptr.vmem [resolvable:$true] %s30
      %36 = dma.hbm_to_vmem [thread:$0]  %s2, 12288, %s31, [#allocation6], 128, 128, 8
    $region13: #{resblock_pallas.1} parent=1 // pred_fallthru
      _
    // Predicated region
    $region14: #{resblock_pallas.1} parent=1 // pred_check
      _
    $region15: #{resblock_pallas.1} parent=1 // pred_check_branch
      %38 = sbr.rel (0) target = $region17
    $region16: #{resblock_pallas.1} parent=1 // pred_region
      _
    $region17: #{resblock_pallas.1} parent=1 // pred_fallthru
      _
    // Predicated region
    $region18: #{resblock_pallas.1} parent=1 // pred_check
      _
    $region19: #{resblock_pallas.1} parent=1 // pred_check_branch
      %40 = sbr.rel (0) target = $region21
    $region20: #{resblock_pallas.1} parent=1 // pred_region
      %41 = dma.done [#allocation4], 12288
    $region21: #{resblock_pallas.1} parent=1 // pred_fallthru
      _
    // Predicated region
    $region22: #{resblock_pallas.1} parent=1 // pred_check
      _
    $region23: #{resblock_pallas.1} parent=1 // pred_check_branch
      %43 = sbr.rel (0) target = $region25
    $region24: #{resblock_pallas.1} parent=1 // pred_region
      %44 = dma.done [#allocation6], 12288
    $region25: #{resblock_pallas.1} parent=1 // pred_fallthru
      _
    %v45 = vlaneseq
    %v46 = vshrl.u32 %v45, 7
    %v47 = vadd.s32 %v46, 8
    %v48 = vadd.s32 %v46, 16
    %v49 = vadd.s32 %v46, 24
    %vm50 = vcmp.lt.s32.totalorder %v46, 0
    %v51 = vsub.s32 0, %v46
    %v52 = vsel %vm50, %v51, %v46
    %v53 = vshrl.u32 %v52, 4
    %v54 = vand.u32 %v52, 15
    %v55 = vsub.s32 0, %v54
    %v56 = vsel %vm50, %v55, %v54
    %vm57 = vcmp.lt.s32.totalorder %v47, 0
    %v58 = vsub.s32 0, %v47
    %v59 = vsel %vm57, %v58, %v47
    %v60 = vshrl.u32 %v59, 4
    %v61 = vand.u32 %v59, 15
    %v62 = vsub.s32 0, %v61
    %v63 = vsel %vm57, %v62, %v61
    %vm64 = vcmp.lt.s32.totalorder %v48, 0
    %v65 = vsub.s32 0, %v48
    %v66 = vsel %vm64, %v65, %v48
    %v67 = vshrl.u32 %v66, 4
    %v68 = vand.u32 %v66, 15
    %v69 = vsub.s32 0, %v68
    %v70 = vsel %vm64, %v69, %v68
    %vm71 = vcmp.lt.s32.totalorder %v49, 0
    %v72 = vsub.s32 0, %v49
    %v73 = vsel %vm71, %v72, %v49
    %v74 = vshrl.u32 %v73, 4
    %v75 = vand.u32 %v73, 15
    %v76 = vsub.s32 0, %v75
    %v77 = vsel %vm71, %v76, %v75
    %vm78 = vcmp.ne.s32.totalorder %v56, 0
    %vm79 = vcmp.ne.s32.totalorder %v63, 0
    %vm80 = vcmp.ne.s32.totalorder %v70, 0
    %vm81 = vcmp.ne.s32.totalorder %v77, 0
    %vm82 = vcmp.lt.s32.totalorder %v56, 0
    %vm83 = vcmp.lt.s32.totalorder %v63, 0
    %vm84 = vcmp.lt.s32.totalorder %v70, 0
    %vm85 = vcmp.lt.s32.totalorder %v77, 0
    %vm86 = vmand %vm82, %vm78
    %vm87 = vmand %vm83, %vm79
    %vm88 = vmand %vm84, %vm80
    %vm89 = vmand %vm85, %vm81
    %v90 = vadd.s32 %v56, 16
    %v91 = vadd.s32 %v63, 16
    %v92 = vadd.s32 %v70, 16
    %v93 = vadd.s32 %v77, 16
    %v94 = vsel %vm86, %v90, %v56
    %v95 = vsel %vm87, %v91, %v63
    %v96 = vsel %vm88, %v92, %v70
    %v97 = vsel %vm89, %v93, %v77
    %vm98 = vcmp.lt.s32.totalorder %v94, 8
    %vm99 = vcmp.lt.s32.totalorder %v95, 8
    %vm100 = vcmp.lt.s32.totalorder %v96, 8
    %vm101 = vcmp.lt.s32.totalorder %v97, 8
    %v102 = vsel %vm98, 1, 0
    %v103 = vsel %vm99, 1, 0
    %v104 = vsel %vm100, 1, 0
    %v105 = vsel %vm101, 1, 0
    %v106 = vcvt.s32.f32 %v102
    %v107 = vcvt.s32.f32 %v103
    %v108 = vcvt.s32.f32 %v104
    %v109 = vcvt.s32.f32 %v105
    %v110 = vadd.s32 %v46, 32
    %v111 = vadd.s32 %v46, 40
    %v112 = vadd.s32 %v46, 48
    %v113 = vadd.s32 %v46, 56
    %v114 = vadd.s32 %v46, 64
    %v115 = vadd.s32 %v46, 72
    %v116 = vadd.s32 %v46, 80
    %v117 = vadd.s32 %v46, 88
    %v118 = vadd.s32 %v46, 96
    %v119 = vadd.s32 %v46, 104
    %v120 = vadd.s32 %v46, 112
    %v121 = vadd.s32 %v46, 120
    %v122 = vadd.s32 %v46, 128
    %v123 = vadd.s32 %v46, 136
    %v124 = vadd.s32 %v46, 144
    %v125 = vadd.s32 %v46, 152
    %v126 = vadd.s32 %v46, 160
    %v127 = vadd.s32 %v46, 168
    %v128 = vadd.s32 %v46, 176
    %v129 = vadd.s32 %v46, 184
    %v130 = vadd.s32 %v46, 192
    %v131 = vadd.s32 %v46, 200
    %v132 = vadd.s32 %v46, 208
    %v133 = vadd.s32 %v46, 216
    %v134 = vadd.s32 %v46, 224
    %v135 = vadd.s32 %v46, 232
    %v136 = vadd.s32 %v46, 240
    %v137 = vadd.s32 %v46, 248
    %v138 = vlaneseq
    %v139 = vand.u32 %v138, 127
    %v140 = vadd.s32 %v139, 128
    %vm141 = vcmp.lt.s32.totalorder %v46, 0
    %v142 = vsub.s32 0, %v46
    %v143 = vsel %vm141, %v142, %v46
    %v144 = vshrl.u32 %v143, 5
    %v145 = vand.u32 %v143, 31
    %v146 = vsub.s32 0, %v145
    %v147 = vsel %vm141, %v146, %v145
    %vm148 = vcmp.lt.s32.totalorder %v47, 0
    %v149 = vsub.s32 0, %v47
    %v150 = vsel %vm148, %v149, %v47
    %v151 = vshrl.u32 %v150, 5
    %v152 = vand.u32 %v150, 31
    %v153 = vsub.s32 0, %v152
    %v154 = vsel %vm148, %v153, %v152
    %vm155 = vcmp.lt.s32.totalorder %v48, 0
    %v156 = vsub.s32 0, %v48
    %v157 = vsel %vm155, %v156, %v48
    %v158 = vshrl.u32 %v157, 5
    %v159 = vand.u32 %v157, 31
    %v160 = vsub.s32 0, %v159
    %v161 = vsel %vm155, %v160, %v159
    %vm162 = vcmp.lt.s32.totalorder %v49, 0
    %v163 = vsub.s32 0, %v49
    %v164 = vsel %vm162, %v163, %v49
    %v165 = vshrl.u32 %v164, 5
    %v166 = vand.u32 %v164, 31
    %v167 = vsub.s32 0, %v166
    %v168 = vsel %vm162, %v167, %v166
    %vm169 = vcmp.lt.s32.totalorder %v110, 0
    %v170 = vsub.s32 0, %v110
    %v171 = vsel %vm169, %v170, %v110
    %v172 = vshrl.u32 %v171, 5
    %v173 = vand.u32 %v171, 31
    %v174 = vsub.s32 0, %v173
    %v175 = vsel %vm169, %v174, %v173
    %vm176 = vcmp.lt.s32.totalorder %v111, 0
    %v177 = vsub.s32 0, %v111
    %v178 = vsel %vm176, %v177, %v111
    %v179 = vshrl.u32 %v178, 5
    %v180 = vand.u32 %v178, 31
    %v181 = vsub.s32 0, %v180
    %v182 = vsel %vm176, %v181, %v180
    %vm183 = vcmp.lt.s32.totalorder %v112, 0
    %v184 = vsub.s32 0, %v112
    %v185 = vsel %vm183, %v184, %v112
    %v186 = vshrl.u32 %v185, 5
    %v187 = vand.u32 %v185, 31
    %v188 = vsub.s32 0, %v187
    %v189 = vsel %vm183, %v188, %v187
    %vm190 = vcmp.lt.s32.totalorder %v113, 0
    %v191 = vsub.s32 0, %v113
    %v192 = vsel %vm190, %v191, %v113
    %v193 = vshrl.u32 %v192, 5
    %v194 = vand.u32 %v192, 31
    %v195 = vsub.s32 0, %v194
    %v196 = vsel %vm190, %v195, %v194
    %vm197 = vcmp.lt.s32.totalorder %v114, 0
    %v198 = vsub.s32 0, %v114
    %v199 = vsel %vm197, %v198, %v114
    %v200 = vshrl.u32 %v199, 5
    %v201 = vand.u32 %v199, 31
    %v202 = vsub.s32 0, %v201
    %v203 = vsel %vm197, %v202, %v201
    %vm204 = vcmp.lt.s32.totalorder %v115, 0
    %v205 = vsub.s32 0, %v115
    %v206 = vsel %vm204, %v205, %v115
    %v207 = vshrl.u32 %v206, 5
    %v208 = vand.u32 %v206, 31
    %v209 = vsub.s32 0, %v208
    %v210 = vsel %vm204, %v209, %v208
    %vm211 = vcmp.lt.s32.totalorder %v116, 0
    %v212 = vsub.s32 0, %v116
    %v213 = vsel %vm211, %v212, %v116
    %v214 = vshrl.u32 %v213, 5
    %v215 = vand.u32 %v213, 31
    %v216 = vsub.s32 0, %v215
    %v217 = vsel %vm211, %v216, %v215
    %vm218 = vcmp.lt.s32.totalorder %v117, 0
    %v219 = vsub.s32 0, %v117
    %v220 = vsel %vm218, %v219, %v117
    %v221 = vshrl.u32 %v220, 5
    %v222 = vand.u32 %v220, 31
    %v223 = vsub.s32 0, %v222
    %v224 = vsel %vm218, %v223, %v222
    %vm225 = vcmp.lt.s32.totalorder %v118, 0
    %v226 = vsub.s32 0, %v118
    %v227 = vsel %vm225, %v226, %v118
    %v228 = vshrl.u32 %v227, 5
    %v229 = vand.u32 %v227, 31
    %v230 = vsub.s32 0, %v229
    %v231 = vsel %vm225, %v230, %v229
    %vm232 = vcmp.lt.s32.totalorder %v119, 0
    %v233 = vsub.s32 0, %v119
    %v234 = vsel %vm232, %v233, %v119
    %v235 = vshrl.u32 %v234, 5
    %v236 = vand.u32 %v234, 31
    %v237 = vsub.s32 0, %v236
    %v238 = vsel %vm232, %v237, %v236
    %vm239 = vcmp.lt.s32.totalorder %v120, 0
    %v240 = vsub.s32 0, %v120
    %v241 = vsel %vm239, %v240, %v120
    %v242 = vshrl.u32 %v241, 5
    %v243 = vand.u32 %v241, 31
    %v244 = vsub.s32 0, %v243
    %v245 = vsel %vm239, %v244, %v243
    %vm246 = vcmp.lt.s32.totalorder %v121, 0
    %v247 = vsub.s32 0, %v121
    %v248 = vsel %vm246, %v247, %v121
    %v249 = vshrl.u32 %v248, 5
    %v250 = vand.u32 %v248, 31
    %v251 = vsub.s32 0, %v250
    %v252 = vsel %vm246, %v251, %v250
    %vm253 = vcmp.lt.s32.totalorder %v122, 0
    %v254 = vsub.s32 0, %v122
    %v255 = vsel %vm253, %v254, %v122
    %v256 = vshrl.u32 %v255, 5
    %v257 = vand.u32 %v255, 31
    %v258 = vsub.s32 0, %v257
    %v259 = vsel %vm253, %v258, %v257
    %vm260 = vcmp.lt.s32.totalorder %v123, 0
    %v261 = vsub.s32 0, %v123
    %v262 = vsel %vm260, %v261, %v123
    %v263 = vshrl.u32 %v262, 5
    %v264 = vand.u32 %v262, 31
    %v265 = vsub.s32 0, %v264
    %v266 = vsel %vm260, %v265, %v264
    %vm267 = vcmp.lt.s32.totalorder %v124, 0
    %v268 = vsub.s32 0, %v124
    %v269 = vsel %vm267, %v268, %v124
    %v270 = vshrl.u32 %v269, 5
    %v271 = vand.u32 %v269, 31
    %v272 = vsub.s32 0, %v271
    %v273 = vsel %vm267, %v272, %v271
    %vm274 = vcmp.lt.s32.totalorder %v125, 0
    %v275 = vsub.s32 0, %v125
    %v276 = vsel %vm274, %v275, %v125
    %v277 = vshrl.u32 %v276, 5
    %v278 = vand.u32 %v276, 31
    %v279 = vsub.s32 0, %v278
    %v280 = vsel %vm274, %v279, %v278
    %vm281 = vcmp.lt.s32.totalorder %v126, 0
    %v282 = vsub.s32 0, %v126
    %v283 = vsel %vm281, %v282, %v126
    %v284 = vshrl.u32 %v283, 5
    %v285 = vand.u32 %v283, 31
    %v286 = vsub.s32 0, %v285
    %v287 = vsel %vm281, %v286, %v285
    %vm288 = vcmp.lt.s32.totalorder %v127, 0
    %v289 = vsub.s32 0, %v127
    %v290 = vsel %vm288, %v289, %v127
    %v291 = vshrl.u32 %v290, 5
    %v292 = vand.u32 %v290, 31
    %v293 = vsub.s32 0, %v292
    %v294 = vsel %vm288, %v293, %v292
    %vm295 = vcmp.lt.s32.totalorder %v128, 0
    %v296 = vsub.s32 0, %v128
    %v297 = vsel %vm295, %v296, %v128
    %v298 = vshrl.u32 %v297, 5
    %v299 = vand.u32 %v297, 31
    %v300 = vsub.s32 0, %v299
    %v301 = vsel %vm295, %v300, %v299
    %vm302 = vcmp.lt.s32.totalorder %v129, 0
    %v303 = vsub.s32 0, %v129
    %v304 = vsel %vm302, %v303, %v129
    %v305 = vshrl.u32 %v304, 5
    %v306 = vand.u32 %v304, 31
    %v307 = vsub.s32 0, %v306
    %v308 = vsel %vm302, %v307, %v306
    %vm309 = vcmp.lt.s32.totalorder %v130, 0
    %v310 = vsub.s32 0, %v130
    %v311 = vsel %vm309, %v310, %v130
    %v312 = vshrl.u32 %v311, 5
    %v313 = vand.u32 %v311, 31
    %v314 = vsub.s32 0, %v313
    %v315 = vsel %vm309, %v314, %v313
    %vm316 = vcmp.lt.s32.totalorder %v131, 0
    %v317 = vsub.s32 0, %v131
    %v318 = vsel %vm316, %v317, %v131
    %v319 = vshrl.u32 %v318, 5
    %v320 = vand.u32 %v318, 31
    %v321 = vsub.s32 0, %v320
    %v322 = vsel %vm316, %v321, %v320
    %vm323 = vcmp.lt.s32.totalorder %v132, 0
    %v324 = vsub.s32 0, %v132
    %v325 = vsel %vm323, %v324, %v132
    %v326 = vshrl.u32 %v325, 5
    %v327 = vand.u32 %v325, 31
    %v328 = vsub.s32 0, %v327
    %v329 = vsel %vm323, %v328, %v327
    %vm330 = vcmp.lt.s32.totalorder %v133, 0
    %v331 = vsub.s32 0, %v133
    %v332 = vsel %vm330, %v331, %v133
    %v333 = vshrl.u32 %v332, 5
    %v334 = vand.u32 %v332, 31
    %v335 = vsub.s32 0, %v334
    %v336 = vsel %vm330, %v335, %v334
    %vm337 = vcmp.lt.s32.totalorder %v134, 0
    %v338 = vsub.s32 0, %v134
    %v339 = vsel %vm337, %v338, %v134
    %v340 = vshrl.u32 %v339, 5
    %v341 = vand.u32 %v339, 31
    %v342 = vsub.s32 0, %v341
    %v343 = vsel %vm337, %v342, %v341
    %vm344 = vcmp.lt.s32.totalorder %v135, 0
    %v345 = vsub.s32 0, %v135
    %v346 = vsel %vm344, %v345, %v135
    %v347 = vshrl.u32 %v346, 5
    %v348 = vand.u32 %v346, 31
    %v349 = vsub.s32 0, %v348
    %v350 = vsel %vm344, %v349, %v348
    %vm351 = vcmp.lt.s32.totalorder %v136, 0
    %v352 = vsub.s32 0, %v136
    %v353 = vsel %vm351, %v352, %v136
    %v354 = vshrl.u32 %v353, 5
    %v355 = vand.u32 %v353, 31
    %v356 = vsub.s32 0, %v355
    %v357 = vsel %vm351, %v356, %v355
    %vm358 = vcmp.lt.s32.totalorder %v137, 0
    %v359 = vsub.s32 0, %v137
    %v360 = vsel %vm358, %v359, %v137
    %v361 = vshrl.u32 %v360, 5
    %v362 = vand.u32 %v360, 31
    %v363 = vsub.s32 0, %v362
    %v364 = vsel %vm358, %v363, %v362
    %vm365 = vcmp.ne.s32.totalorder %v147, 0
    %vm366 = vcmp.ne.s32.totalorder %v154, 0
    %vm367 = vcmp.ne.s32.totalorder %v161, 0
    %vm368 = vcmp.ne.s32.totalorder %v168, 0
    %vm369 = vcmp.ne.s32.totalorder %v175, 0
    %vm370 = vcmp.ne.s32.totalorder %v182, 0
    %vm371 = vcmp.ne.s32.totalorder %v189, 0
    %vm372 = vcmp.ne.s32.totalorder %v196, 0
    %vm373 = vcmp.ne.s32.totalorder %v203, 0
    %vm374 = vcmp.ne.s32.totalorder %v210, 0
    %vm375 = vcmp.ne.s32.totalorder %v217, 0
    %vm376 = vcmp.ne.s32.totalorder %v224, 0
    %vm377 = vcmp.ne.s32.totalorder %v231, 0
    %vm378 = vcmp.ne.s32.totalorder %v238, 0
    %vm379 = vcmp.ne.s32.totalorder %v245, 0
    %vm380 = vcmp.ne.s32.totalorder %v252, 0
    %vm381 = vcmp.ne.s32.totalorder %v259, 0
    %vm382 = vcmp.ne.s32.totalorder %v266, 0
    %vm383 = vcmp.ne.s32.totalorder %v273, 0
    %vm384 = vcmp.ne.s32.totalorder %v280, 0
    %vm385 = vcmp.ne.s32.totalorder %v287, 0
    %vm386 = vcmp.ne.s32.totalorder %v294, 0
    %vm387 = vcmp.ne.s32.totalorder %v301, 0
    %vm388 = vcmp.ne.s32.totalorder %v308, 0
    %vm389 = vcmp.ne.s32.totalorder %v315, 0
    %vm390 = vcmp.ne.s32.totalorder %v322, 0
    %vm391 = vcmp.ne.s32.totalorder %v329, 0
    %vm392 = vcmp.ne.s32.totalorder %v336, 0
    %vm393 = vcmp.ne.s32.totalorder %v343, 0
    %vm394 = vcmp.ne.s32.totalorder %v350, 0
    %vm395 = vcmp.ne.s32.totalorder %v357, 0
    %vm396 = vcmp.ne.s32.totalorder %v364, 0
    %vm397 = vcmp.lt.s32.totalorder %v147, 0
    %vm398 = vcmp.lt.s32.totalorder %v154, 0
    %vm399 = vcmp.lt.s32.totalorder %v161, 0
    %vm400 = vcmp.lt.s32.totalorder %v168, 0
    %vm401 = vcmp.lt.s32.totalorder %v175, 0
    %vm402 = vcmp.lt.s32.totalorder %v182, 0
    %vm403 = vcmp.lt.s32.totalorder %v189, 0
    %vm404 = vcmp.lt.s32.totalorder %v196, 0
    %vm405 = vcmp.lt.s32.totalorder %v203, 0
    %vm406 = vcmp.lt.s32.totalorder %v210, 0
    %vm407 = vcmp.lt.s32.totalorder %v217, 0
    %vm408 = vcmp.lt.s32.totalorder %v224, 0
    %vm409 = vcmp.lt.s32.totalorder %v231, 0
    %vm410 = vcmp.lt.s32.totalorder %v238, 0
    %vm411 = vcmp.lt.s32.totalorder %v245, 0
    %vm412 = vcmp.lt.s32.totalorder %v252, 0
    %vm413 = vcmp.lt.s32.totalorder %v259, 0
    %vm414 = vcmp.lt.s32.totalorder %v266, 0
    %vm415 = vcmp.lt.s32.totalorder %v273, 0
    %vm416 = vcmp.lt.s32.totalorder %v280, 0
    %vm417 = vcmp.lt.s32.totalorder %v287, 0
    %vm418 = vcmp.lt.s32.totalorder %v294, 0
    %vm419 = vcmp.lt.s32.totalorder %v301, 0
    %vm420 = vcmp.lt.s32.totalorder %v308, 0
    %vm421 = vcmp.lt.s32.totalorder %v315, 0
    %vm422 = vcmp.lt.s32.totalorder %v322, 0
    %vm423 = vcmp.lt.s32.totalorder %v329, 0
    %vm424 = vcmp.lt.s32.totalorder %v336, 0
    %vm425 = vcmp.lt.s32.totalorder %v343, 0
    %vm426 = vcmp.lt.s32.totalorder %v350, 0
    %vm427 = vcmp.lt.s32.totalorder %v357, 0
    %vm428 = vcmp.lt.s32.totalorder %v364, 0
    %vm429 = vmand %vm397, %vm365
    %vm430 = vmand %vm398, %vm366
    %vm431 = vmand %vm399, %vm367
    %vm432 = vmand %vm400, %vm368
    %vm433 = vmand %vm401, %vm369
    %vm434 = vmand %vm402, %vm370
    %vm435 = vmand %vm403, %vm371
    %vm436 = vmand %vm404, %vm372
    %vm437 = vmand %vm405, %vm373
    %vm438 = vmand %vm406, %vm374
    %vm439 = vmand %vm407, %vm375
    %vm440 = vmand %vm408, %vm376
    %vm441 = vmand %vm409, %vm377
    %vm442 = vmand %vm410, %vm378
    %vm443 = vmand %vm411, %vm379
    %vm444 = vmand %vm412, %vm380
    %vm445 = vmand %vm413, %vm381
    %vm446 = vmand %vm414, %vm382
    %vm447 = vmand %vm415, %vm383
    %vm448 = vmand %vm416, %vm384
    %vm449 = vmand %vm417, %vm385
    %vm450 = vmand %vm418, %vm386
    %vm451 = vmand %vm419, %vm387
    %vm452 = vmand %vm420, %vm388
    %vm453 = vmand %vm421, %vm389
    %vm454 = vmand %vm422, %vm390
    %vm455 = vmand %vm423, %vm391
    %vm456 = vmand %vm424, %vm392
    %vm457 = vmand %vm425, %vm393
    %vm458 = vmand %vm426, %vm394
    %vm459 = vmand %vm427, %vm395
    %vm460 = vmand %vm428, %vm396
    %v461 = vadd.s32 %v147, 32
    %v462 = vadd.s32 %v154, 32
    %v463 = vadd.s32 %v161, 32
    %v464 = vadd.s32 %v168, 32
    %v465 = vadd.s32 %v175, 32
    %v466 = vadd.s32 %v182, 32
    %v467 = vadd.s32 %v189, 32
    %v468 = vadd.s32 %v196, 32
    %v469 = vadd.s32 %v203, 32
    %v470 = vadd.s32 %v210, 32
    %v471 = vadd.s32 %v217, 32
    %v472 = vadd.s32 %v224, 32
    %v473 = vadd.s32 %v231, 32
    %v474 = vadd.s32 %v238, 32
    %v475 = vadd.s32 %v245, 32
    %v476 = vadd.s32 %v252, 32
    %v477 = vadd.s32 %v259, 32
    %v478 = vadd.s32 %v266, 32
    %v479 = vadd.s32 %v273, 32
    %v480 = vadd.s32 %v280, 32
    %v481 = vadd.s32 %v287, 32
    %v482 = vadd.s32 %v294, 32
    %v483 = vadd.s32 %v301, 32
    %v484 = vadd.s32 %v308, 32
    %v485 = vadd.s32 %v315, 32
    %v486 = vadd.s32 %v322, 32
    %v487 = vadd.s32 %v329, 32
    %v488 = vadd.s32 %v336, 32
    %v489 = vadd.s32 %v343, 32
    %v490 = vadd.s32 %v350, 32
    %v491 = vadd.s32 %v357, 32
    %v492 = vadd.s32 %v364, 32
    %v493 = vsel %vm429, %v461, %v147
    %v494 = vsel %vm430, %v462, %v154
    %v495 = vsel %vm431, %v463, %v161
    %v496 = vsel %vm432, %v464, %v168
    %v497 = vsel %vm433, %v465, %v175
    %v498 = vsel %vm434, %v466, %v182
    %v499 = vsel %vm435, %v467, %v189
    %v500 = vsel %vm436, %v468, %v196
    %v501 = vsel %vm437, %v469, %v203
    %v502 = vsel %vm438, %v470, %v210
    %v503 = vsel %vm439, %v471, %v217
    %v504 = vsel %vm440, %v472, %v224
    %v505 = vsel %vm441, %v473, %v231
    %v506 = vsel %vm442, %v474, %v238
    %v507 = vsel %vm443, %v475, %v245
    %v508 = vsel %vm444, %v476, %v252
    %v509 = vsel %vm445, %v477, %v259
    %v510 = vsel %vm446, %v478, %v266
    %v511 = vsel %vm447, %v479, %v273
    %v512 = vsel %vm448, %v480, %v280
    %v513 = vsel %vm449, %v481, %v287
    %v514 = vsel %vm450, %v482, %v294
    %v515 = vsel %vm451, %v483, %v301
    %v516 = vsel %vm452, %v484, %v308
    %v517 = vsel %vm453, %v485, %v315
    %v518 = vsel %vm454, %v486, %v322
    %v519 = vsel %vm455, %v487, %v329
    %v520 = vsel %vm456, %v488, %v336
    %v521 = vsel %vm457, %v489, %v343
    %v522 = vsel %vm458, %v490, %v350
    %v523 = vsel %vm459, %v491, %v357
    %v524 = vsel %vm460, %v492, %v364
    %vm525 = vcmp.lt.s32.totalorder %v139, 0
    %v526 = vsub.s32 0, %v139
    %v527 = vsel %vm525, %v526, %v139
    %v528 = vshrl.u32 %v527, 5
    %v529 = vand.u32 %v527, 31
    %v530 = vsub.s32 0, %v529
    %v531 = vsel %vm525, %v530, %v529
    %vm532 = vcmp.lt.s32.totalorder %v140, 0
    %v533 = vsub.s32 0, %v140
    %v534 = vsel %vm532, %v533, %v140
    %v535 = vshrl.u32 %v534, 5
    %v536 = vand.u32 %v534, 31
    %v537 = vsub.s32 0, %v536
    %v538 = vsel %vm532, %v537, %v536
    %vm539 = vcmp.ne.s32.totalorder %v531, 0
    %vm540 = vcmp.ne.s32.totalorder %v538, 0
    %vm541 = vcmp.lt.s32.totalorder %v531, 0
    %vm542 = vcmp.lt.s32.totalorder %v538, 0
    %vm543 = vmand %vm541, %vm539
    %vm544 = vmand %vm542, %vm540
    %v545 = vadd.s32 %v531, 32
    %v546 = vadd.s32 %v538, 32
    %v547 = vsel %vm543, %v545, %v531
    %v548 = vsel %vm544, %v546, %v538
    %vm549 = vcmp.eq.s32.totalorder %v493, %v547
    %vm550 = vcmp.eq.s32.totalorder %v493, %v548
    %vm551 = vcmp.eq.s32.totalorder %v494, %v547
    %vm552 = vcmp.eq.s32.totalorder %v494, %v548
    %vm553 = vcmp.eq.s32.totalorder %v495, %v547
    %vm554 = vcmp.eq.s32.totalorder %v495, %v548
    %vm555 = vcmp.eq.s32.totalorder %v496, %v547
    %vm556 = vcmp.eq.s32.totalorder %v496, %v548
    %vm557 = vcmp.eq.s32.totalorder %v497, %v547
    %vm558 = vcmp.eq.s32.totalorder %v497, %v548
    %vm559 = vcmp.eq.s32.totalorder %v498, %v547
    %vm560 = vcmp.eq.s32.totalorder %v498, %v548
    %vm561 = vcmp.eq.s32.totalorder %v499, %v547
    %vm562 = vcmp.eq.s32.totalorder %v499, %v548
    %vm563 = vcmp.eq.s32.totalorder %v500, %v547
    %vm564 = vcmp.eq.s32.totalorder %v500, %v548
    %vm565 = vcmp.eq.s32.totalorder %v501, %v547
    %vm566 = vcmp.eq.s32.totalorder %v501, %v548
    %vm567 = vcmp.eq.s32.totalorder %v502, %v547
    %vm568 = vcmp.eq.s32.totalorder %v502, %v548
    %vm569 = vcmp.eq.s32.totalorder %v503, %v547
    %vm570 = vcmp.eq.s32.totalorder %v503, %v548
    %vm571 = vcmp.eq.s32.totalorder %v504, %v547
    %vm572 = vcmp.eq.s32.totalorder %v504, %v548
    %vm573 = vcmp.eq.s32.totalorder %v505, %v547
    %vm574 = vcmp.eq.s32.totalorder %v505, %v548
    %vm575 = vcmp.eq.s32.totalorder %v506, %v547
    %vm576 = vcmp.eq.s32.totalorder %v506, %v548
    %vm577 = vcmp.eq.s32.totalorder %v507, %v547
    %vm578 = vcmp.eq.s32.totalorder %v507, %v548
    %vm579 = vcmp.eq.s32.totalorder %v508, %v547
    %vm580 = vcmp.eq.s32.totalorder %v508, %v548
    %vm581 = vcmp.eq.s32.totalorder %v509, %v547
    %vm582 = vcmp.eq.s32.totalorder %v509, %v548
    %vm583 = vcmp.eq.s32.totalorder %v510, %v547
    %vm584 = vcmp.eq.s32.totalorder %v510, %v548
    %vm585 = vcmp.eq.s32.totalorder %v511, %v547
    %vm586 = vcmp.eq.s32.totalorder %v511, %v548
    %vm587 = vcmp.eq.s32.totalorder %v512, %v547
    %vm588 = vcmp.eq.s32.totalorder %v512, %v548
    %vm589 = vcmp.eq.s32.totalorder %v513, %v547
    %vm590 = vcmp.eq.s32.totalorder %v513, %v548
    %vm591 = vcmp.eq.s32.totalorder %v514, %v547
    %vm592 = vcmp.eq.s32.totalorder %v514, %v548
    %vm593 = vcmp.eq.s32.totalorder %v515, %v547
    %vm594 = vcmp.eq.s32.totalorder %v515, %v548
    %vm595 = vcmp.eq.s32.totalorder %v516, %v547
    %vm596 = vcmp.eq.s32.totalorder %v516, %v548
    %vm597 = vcmp.eq.s32.totalorder %v517, %v547
    %vm598 = vcmp.eq.s32.totalorder %v517, %v548
    %vm599 = vcmp.eq.s32.totalorder %v518, %v547
    %vm600 = vcmp.eq.s32.totalorder %v518, %v548
    %vm601 = vcmp.eq.s32.totalorder %v519, %v547
    %vm602 = vcmp.eq.s32.totalorder %v519, %v548
    %vm603 = vcmp.eq.s32.totalorder %v520, %v547
    %vm604 = vcmp.eq.s32.totalorder %v520, %v548
    %vm605 = vcmp.eq.s32.totalorder %v521, %v547
    %vm606 = vcmp.eq.s32.totalorder %v521, %v548
    %vm607 = vcmp.eq.s32.totalorder %v522, %v547
    %vm608 = vcmp.eq.s32.totalorder %v522, %v548
    %vm609 = vcmp.eq.s32.totalorder %v523, %v547
    %vm610 = vcmp.eq.s32.totalorder %v523, %v548
    %vm611 = vcmp.eq.s32.totalorder %v524, %v547
    %vm612 = vcmp.eq.s32.totalorder %v524, %v548
    %v613 = vsel %vm549, 0.0078125, 0.0
    %v614 = vsel %vm550, 0.0078125, 0.0
    %v615 = vsel %vm551, 0.0078125, 0.0
    %v616 = vsel %vm552, 0.0078125, 0.0
    %v617 = vsel %vm553, 0.0078125, 0.0
    %v618 = vsel %vm554, 0.0078125, 0.0
    %v619 = vsel %vm555, 0.0078125, 0.0
    %v620 = vsel %vm556, 0.0078125, 0.0
    %v621 = vsel %vm557, 0.0078125, 0.0
    %v622 = vsel %vm558, 0.0078125, 0.0
    %v623 = vsel %vm559, 0.0078125, 0.0
    %v624 = vsel %vm560, 0.0078125, 0.0
    %v625 = vsel %vm561, 0.0078125, 0.0
    %v626 = vsel %vm562, 0.0078125, 0.0
    %v627 = vsel %vm563, 0.0078125, 0.0
    %v628 = vsel %vm564, 0.0078125, 0.0
    %v629 = vsel %vm565, 0.0078125, 0.0
    %v630 = vsel %vm566, 0.0078125, 0.0
    %v631 = vsel %vm567, 0.0078125, 0.0
    %v632 = vsel %vm568, 0.0078125, 0.0
    %v633 = vsel %vm569, 0.0078125, 0.0
    %v634 = vsel %vm570, 0.0078125, 0.0
    %v635 = vsel %vm571, 0.0078125, 0.0
    %v636 = vsel %vm572, 0.0078125, 0.0
    %v637 = vsel %vm573, 0.0078125, 0.0
    %v638 = vsel %vm574, 0.0078125, 0.0
    %v639 = vsel %vm575, 0.0078125, 0.0
    %v640 = vsel %vm576, 0.0078125, 0.0
    %v641 = vsel %vm577, 0.0078125, 0.0
    %v642 = vsel %vm578, 0.0078125, 0.0
    %v643 = vsel %vm579, 0.0078125, 0.0
    %v644 = vsel %vm580, 0.0078125, 0.0
    %v645 = vsel %vm581, 0.0078125, 0.0
    %v646 = vsel %vm582, 0.0078125, 0.0
    %v647 = vsel %vm583, 0.0078125, 0.0
    %v648 = vsel %vm584, 0.0078125, 0.0
    %v649 = vsel %vm585, 0.0078125, 0.0
    %v650 = vsel %vm586, 0.0078125, 0.0
    %v651 = vsel %vm587, 0.0078125, 0.0
    %v652 = vsel %vm588, 0.0078125, 0.0
    %v653 = vsel %vm589, 0.0078125, 0.0
    %v654 = vsel %vm590, 0.0078125, 0.0
    %v655 = vsel %vm591, 0.0078125, 0.0
    %v656 = vsel %vm592, 0.0078125, 0.0
    %v657 = vsel %vm593, 0.0078125, 0.0
    %v658 = vsel %vm594, 0.0078125, 0.0
    %v659 = vsel %vm595, 0.0078125, 0.0
    %v660 = vsel %vm596, 0.0078125, 0.0
    %v661 = vsel %vm597, 0.0078125, 0.0
    %v662 = vsel %vm598, 0.0078125, 0.0
    %v663 = vsel %vm599, 0.0078125, 0.0
    %v664 = vsel %vm600, 0.0078125, 0.0
    %v665 = vsel %vm601, 0.0078125, 0.0
    %v666 = vsel %vm602, 0.0078125, 0.0
    %v667 = vsel %vm603, 0.0078125, 0.0
    %v668 = vsel %vm604, 0.0078125, 0.0
    %v669 = vsel %vm605, 0.0078125, 0.0
    %v670 = vsel %vm606, 0.0078125, 0.0
    %v671 = vsel %vm607, 0.0078125, 0.0
    %v672 = vsel %vm608, 0.0078125, 0.0
    %v673 = vsel %vm609, 0.0078125, 0.0
    %v674 = vsel %vm610, 0.0078125, 0.0
    %v675 = vsel %vm611, 0.0078125, 0.0
    %v676 = vsel %vm612, 0.0078125, 0.0
    %v677 = vld [vmem:[%s0] sm:$0xff]
    %v678 = vld [vmem:[%s0 + $0x8] sm:$0xff]
    %v679 = vld [vmem:[%s0 + $0x10] sm:$0xff]
    %v680 = vld [vmem:[%s0 + $0x18] sm:$0xff]
    %v681 = vld [vmem:[%s0 + $0x20] sm:$0xff]
    %v682 = vld [vmem:[%s0 + $0x28] sm:$0xff]
    %v683 = vld [vmem:[%s0 + $0x30] sm:$0xff]
    %v684 = vld [vmem:[%s0 + $0x38] sm:$0xff]
    %v685 = vld [vmem:[%s0] sm:$0xfe]
    %v686 = vld [vmem:[%s0 + $0x8] sm:$0xfe]
    %v687 = vld [vmem:[%s0 + $0x10] sm:$0xff]
    %v688 = vld [vmem:[%s0 + $0x18] sm:$0xff]
    %v689 = vld [vmem:[%s0 + $0x20] sm:$0xff]
    %v690 = vld [vmem:[%s0 + $0x28] sm:$0xff]
    %v691 = vld [vmem:[%s0 + $0x30] sm:$0xff]
    %v692 = vld [vmem:[%s0 + $0x38] sm:$0xff]
    %v693 = vld [vmem:[%s0 + $0x40] sm:$0x1]
    %v694 = vld [vmem:[%s0 + $0x48] sm:$0x1]
    %v695 = vld [vmem:[%s0] sm:$0xfc]
    %v696 = vld [vmem:[%s0 + $0x8] sm:$0xfc]
    %v697 = vld [vmem:[%s0 + $0x40] sm:$0x3]
    %v698 = vld [vmem:[%s0 + $0x48] sm:$0x3]
    %vm709 = vcmask 1046528
    %v710 = vrot.slane %v685, 1
    %v711 = vrot.slane %v687, 1
    %v712 = vsel %vm709, %v710, %v711
    %v713 = vrot.slane %v686, 1
    %v714 = vrot.slane %v688, 1
    %v715 = vsel %vm709, %v713, %v714
    %v716 = vrot.slane %v689, 1
    %v717 = vsel %vm709, %v711, %v716
    %v718 = vrot.slane %v690, 1
    %v719 = vsel %vm709, %v714, %v718
    %v720 = vrot.slane %v691, 1
    %v721 = vsel %vm709, %v716, %v720
    %v722 = vrot.slane %v692, 1
    %v723 = vsel %vm709, %v718, %v722
    %v724 = vrot.slane %v693, 1
    %v725 = vsel %vm709, %v720, %v724
    %v726 = vrot.slane %v694, 1
    %v727 = vsel %vm709, %v722, %v726
    %vm740 = vcmask 1045504
    %v741 = vrot.slane %v695, 2
    %v742 = vrot.slane %v687, 2
    %v743 = vsel %vm740, %v741, %v742
    %v744 = vrot.slane %v696, 2
    %v745 = vrot.slane %v688, 2
    %v746 = vsel %vm740, %v744, %v745
    %v747 = vrot.slane %v689, 2
    %v748 = vsel %vm740, %v742, %v747
    %v749 = vrot.slane %v690, 2
    %v750 = vsel %vm740, %v745, %v749
    %v751 = vrot.slane %v691, 2
    %v752 = vsel %vm740, %v747, %v751
    %v753 = vrot.slane %v692, 2
    %v754 = vsel %vm740, %v749, %v753
    %v755 = vrot.slane %v697, 2
    %v756 = vsel %vm740, %v751, %v755
    %v757 = vrot.slane %v698, 2
    %v758 = vsel %vm740, %v753, %v757
    %v767 = vpack.c.bf16 %v679, %v677
    %v768 = vpack.c.bf16 %v680, %v678
    %v769 = vpack.c.bf16 %v717, %v712
    %v770 = vpack.c.bf16 %v719, %v715
    %v771 = vpack.c.bf16 %v748, %v743
    %v772 = vpack.c.bf16 %v750, %v746
    %v773 = vpack.c.bf16 %v683, %v681
    %v774 = vpack.c.bf16 %v684, %v682
    %v775 = vpack.c.bf16 %v725, %v721
    %v776 = vpack.c.bf16 %v727, %v723
    %v777 = vpack.c.bf16 %v756, %v752
    %v778 = vpack.c.bf16 %v758, %v754
    %v779 = vld [vmem:[#allocation3] sm:$0xff]
    %v780 = vld [vmem:[#allocation3 + $0x8] sm:$0xff]
    %v781 = vld [vmem:[#allocation3 + $0x10] sm:$0xff]
    %v782 = vld [vmem:[#allocation3 + $0x18] sm:$0xff]
    %v783 = vld [vmem:[#allocation3 + $0x20] sm:$0xff]
    %v784 = vld [vmem:[#allocation3 + $0x28] sm:$0xff]
    %v785 = vld [vmem:[#allocation3 + $0x30] sm:$0xff]
    %v786 = vld [vmem:[#allocation3 + $0x38] sm:$0xff]
    %v787 = vld [vmem:[#allocation3 + $0x40] sm:$0xff]
    %v788 = vld [vmem:[#allocation3 + $0x48] sm:$0xff]
    %v789 = vld [vmem:[#allocation3 + $0x50] sm:$0xff]
    %v790 = vld [vmem:[#allocation3 + $0x58] sm:$0xff]
    %v791 = vld [vmem:[#allocation3 + $0x60] sm:$0xff]
    %v792 = vld [vmem:[#allocation3 + $0x68] sm:$0xff]
    %v793 = vld [vmem:[#allocation3 + $0x70] sm:$0xff]
    %v794 = vld [vmem:[#allocation3 + $0x78] sm:$0xff]
    %v795 = vld [vmem:[#allocation3 + $0x80] sm:$0xff]
    %v796 = vld [vmem:[#allocation3 + $0x88] sm:$0xff]
    %v797 = vld [vmem:[#allocation3 + $0x90] sm:$0xff]
    %v798 = vld [vmem:[#allocation3 + $0x98] sm:$0xff]
    %v799 = vld [vmem:[#allocation3 + $0xa0] sm:$0xff]
    %v800 = vld [vmem:[#allocation3 + $0xa8] sm:$0xff]
    %v801 = vld [vmem:[#allocation3 + $0xb0] sm:$0xff]
    %v802 = vld [vmem:[#allocation3 + $0xb8] sm:$0xff]
    %v803 = vld [vmem:[#allocation3 + $0xc0] sm:$0xff]
    %v804 = vld [vmem:[#allocation3 + $0xc8] sm:$0xff]
    %v805 = vld [vmem:[#allocation3 + $0xd0] sm:$0xff]
    %v806 = vld [vmem:[#allocation3 + $0xd8] sm:$0xff]
    %v807 = vld [vmem:[#allocation3 + $0xe0] sm:$0xff]
    %v808 = vld [vmem:[#allocation3 + $0xe8] sm:$0xff]
    %v809 = vld [vmem:[#allocation3 + $0xf0] sm:$0xff]
    %v810 = vld [vmem:[#allocation3 + $0xf8] sm:$0xff]
    %v811 = vld [vmem:[#allocation3 + $0x100] sm:$0xff]
    %v812 = vld [vmem:[#allocation3 + $0x108] sm:$0xff]
    %v813 = vld [vmem:[#allocation3 + $0x110] sm:$0xff]
    %v814 = vld [vmem:[#allocation3 + $0x118] sm:$0xff]
    %v815 = vld [vmem:[#allocation3 + $0x120] sm:$0xff]
    %v816 = vld [vmem:[#allocation3 + $0x128] sm:$0xff]
    %v817 = vld [vmem:[#allocation3 + $0x130] sm:$0xff]
    %v818 = vld [vmem:[#allocation3 + $0x138] sm:$0xff]
    %v819 = vld [vmem:[#allocation3 + $0x140] sm:$0xff]
    %v820 = vld [vmem:[#allocation3 + $0x148] sm:$0xff]
    %v821 = vld [vmem:[#allocation3 + $0x150] sm:$0xff]
    %v822 = vld [vmem:[#allocation3 + $0x158] sm:$0xff]
    %v823 = vld [vmem:[#allocation3 + $0x160] sm:$0xff]
    %v824 = vld [vmem:[#allocation3 + $0x168] sm:$0xff]
    %v825 = vld [vmem:[#allocation3 + $0x170] sm:$0xff]
    %v826 = vld [vmem:[#allocation3 + $0x178] sm:$0xff]
    %v827 = vld [vmem:[#allocation3 + $0x180] sm:$0xff]
    %v828 = vld [vmem:[#allocation3 + $0x188] sm:$0xff]
    %v829 = vld [vmem:[#allocation3 + $0x190] sm:$0xff]
    %v830 = vld [vmem:[#allocation3 + $0x198] sm:$0xff]
    %v831 = vld [vmem:[#allocation3 + $0x1a0] sm:$0xff]
    %v832 = vld [vmem:[#allocation3 + $0x1a8] sm:$0xff]
    %v833 = vld [vmem:[#allocation3 + $0x1b0] sm:$0xff]
    %v834 = vld [vmem:[#allocation3 + $0x1b8] sm:$0xff]
    %v835 = vld [vmem:[#allocation3 + $0x1c0] sm:$0xff]
    %v836 = vld [vmem:[#allocation3 + $0x1c8] sm:$0xff]
    %v837 = vld [vmem:[#allocation3 + $0x1d0] sm:$0xff]
    %v838 = vld [vmem:[#allocation3 + $0x1d8] sm:$0xff]
    %v839 = vld [vmem:[#allocation3 + $0x1e0] sm:$0xff]
    %v840 = vld [vmem:[#allocation3 + $0x1e8] sm:$0xff]
    %v841 = vld [vmem:[#allocation3 + $0x1f0] sm:$0xff]
    %v842 = vld [vmem:[#allocation3 + $0x1f8] sm:$0xff]
    %v843 = vld [vmem:[#allocation3 + $0x200] sm:$0xff]
    %v844 = vld [vmem:[#allocation3 + $0x208] sm:$0xff]
    %v845 = vld [vmem:[#allocation3 + $0x210] sm:$0xff]
    %v846 = vld [vmem:[#allocation3 + $0x218] sm:$0xff]
    %v847 = vld [vmem:[#allocation3 + $0x220] sm:$0xff]
    %v848 = vld [vmem:[#allocation3 + $0x228] sm:$0xff]
    %v849 = vld [vmem:[#allocation3 + $0x230] sm:$0xff]
    %v850 = vld [vmem:[#allocation3 + $0x238] sm:$0xff]
    %v851 = vld [vmem:[#allocation3 + $0x240] sm:$0xff]
    %v852 = vld [vmem:[#allocation3 + $0x248] sm:$0xff]
    %v853 = vld [vmem:[#allocation3 + $0x250] sm:$0xff]
    %v854 = vld [vmem:[#allocation3 + $0x258] sm:$0xff]
    %v855 = vld [vmem:[#allocation3 + $0x260] sm:$0xff]
    %v856 = vld [vmem:[#allocation3 + $0x268] sm:$0xff]
    %v857 = vld [vmem:[#allocation3 + $0x270] sm:$0xff]
    %v858 = vld [vmem:[#allocation3 + $0x278] sm:$0xff]
    %v859 = vld [vmem:[#allocation3 + $0x280] sm:$0xff]
    %v860 = vld [vmem:[#allocation3 + $0x288] sm:$0xff]
    %v861 = vld [vmem:[#allocation3 + $0x290] sm:$0xff]
    %v862 = vld [vmem:[#allocation3 + $0x298] sm:$0xff]
    %v863 = vld [vmem:[#allocation3 + $0x2a0] sm:$0xff]
    %v864 = vld [vmem:[#allocation3 + $0x2a8] sm:$0xff]
    %v865 = vld [vmem:[#allocation3 + $0x2b0] sm:$0xff]
    %v866 = vld [vmem:[#allocation3 + $0x2b8] sm:$0xff]
    %v867 = vld [vmem:[#allocation3 + $0x2c0] sm:$0xff]
    %v868 = vld [vmem:[#allocation3 + $0x2c8] sm:$0xff]
    %v869 = vld [vmem:[#allocation3 + $0x2d0] sm:$0xff]
    %v870 = vld [vmem:[#allocation3 + $0x2d8] sm:$0xff]
    %v871 = vld [vmem:[#allocation3 + $0x2e0] sm:$0xff]
    %v872 = vld [vmem:[#allocation3 + $0x2e8] sm:$0xff]
    %v873 = vld [vmem:[#allocation3 + $0x2f0] sm:$0xff]
    %v874 = vld [vmem:[#allocation3 + $0x2f8] sm:$0xff]
    %v971 = vunpack.c.l.b16 %v779
    %v972 = vunpack.c.h.b16 %v779
    %v973 = vunpack.c.l.b16 %v780
    %v974 = vunpack.c.h.b16 %v780
    %v975 = vunpack.c.l.b16 %v781
    %v976 = vunpack.c.h.b16 %v781
    %v977 = vunpack.c.l.b16 %v782
    %v978 = vunpack.c.h.b16 %v782
    %v979 = vunpack.c.l.b16 %v783
    %v980 = vunpack.c.h.b16 %v783
    %v981 = vunpack.c.l.b16 %v784
    %v982 = vunpack.c.h.b16 %v784
    %v983 = vunpack.c.l.b16 %v785
    %v984 = vunpack.c.h.b16 %v785
    %v985 = vunpack.c.l.b16 %v786
    %v986 = vunpack.c.h.b16 %v786
    %v987 = vunpack.c.l.b16 %v787
    %v988 = vunpack.c.h.b16 %v787
    %v989 = vunpack.c.l.b16 %v788
    %v990 = vunpack.c.h.b16 %v788
    %v991 = vunpack.c.l.b16 %v789
    %v992 = vunpack.c.h.b16 %v789
    %v993 = vunpack.c.l.b16 %v790
    %v994 = vunpack.c.h.b16 %v790
    %v995 = vunpack.c.l.b16 %v791
    %v996 = vunpack.c.h.b16 %v791
    %v997 = vunpack.c.l.b16 %v792
    %v998 = vunpack.c.h.b16 %v792
    %v999 = vunpack.c.l.b16 %v793
    %v1000 = vunpack.c.h.b16 %v793
    %v1001 = vunpack.c.l.b16 %v794
    %v1002 = vunpack.c.h.b16 %v794
    %v1003 = vunpack.c.l.b16 %v795
    %v1004 = vunpack.c.h.b16 %v795
    %v1005 = vunpack.c.l.b16 %v796
    %v1006 = vunpack.c.h.b16 %v796
    %v1007 = vunpack.c.l.b16 %v797
    %v1008 = vunpack.c.h.b16 %v797
    %v1009 = vunpack.c.l.b16 %v798
    %v1010 = vunpack.c.h.b16 %v798
    %v1011 = vunpack.c.l.b16 %v799
    %v1012 = vunpack.c.h.b16 %v799
    %v1013 = vunpack.c.l.b16 %v800
    %v1014 = vunpack.c.h.b16 %v800
    %v1015 = vunpack.c.l.b16 %v801
    %v1016 = vunpack.c.h.b16 %v801
    %v1017 = vunpack.c.l.b16 %v802
    %v1018 = vunpack.c.h.b16 %v802
    %v1019 = vunpack.c.l.b16 %v803
    %v1020 = vunpack.c.h.b16 %v803
    %v1021 = vunpack.c.l.b16 %v804
    %v1022 = vunpack.c.h.b16 %v804
    %v1023 = vunpack.c.l.b16 %v805
    %v1024 = vunpack.c.h.b16 %v805
    %v1025 = vunpack.c.l.b16 %v806
    %v1026 = vunpack.c.h.b16 %v806
    %v1027 = vunpack.c.l.b16 %v807
    %v1028 = vunpack.c.h.b16 %v807
    %v1029 = vunpack.c.l.b16 %v808
    %v1030 = vunpack.c.h.b16 %v808
    %v1031 = vunpack.c.l.b16 %v809
    %v1032 = vunpack.c.h.b16 %v809
    %v1033 = vunpack.c.l.b16 %v810
    %v1034 = vunpack.c.h.b16 %v810
    %v1035 = vunpack.c.l.b16 %v811
    %v1036 = vunpack.c.h.b16 %v811
    %v1037 = vunpack.c.l.b16 %v812
    %v1038 = vunpack.c.h.b16 %v812
    %v1039 = vunpack.c.l.b16 %v813
    %v1040 = vunpack.c.h.b16 %v813
    %v1041 = vunpack.c.l.b16 %v814
    %v1042 = vunpack.c.h.b16 %v814
    %v1043 = vunpack.c.l.b16 %v815
    %v1044 = vunpack.c.h.b16 %v815
    %v1045 = vunpack.c.l.b16 %v816
    %v1046 = vunpack.c.h.b16 %v816
    %v1047 = vunpack.c.l.b16 %v817
    %v1048 = vunpack.c.h.b16 %v817
    %v1049 = vunpack.c.l.b16 %v818
    %v1050 = vunpack.c.h.b16 %v818
    %v1051 = vunpack.c.l.b16 %v819
    %v1052 = vunpack.c.h.b16 %v819
    %v1053 = vunpack.c.l.b16 %v820
    %v1054 = vunpack.c.h.b16 %v820
    %v1055 = vunpack.c.l.b16 %v821
    %v1056 = vunpack.c.h.b16 %v821
    %v1057 = vunpack.c.l.b16 %v822
    %v1058 = vunpack.c.h.b16 %v822
    %v1059 = vunpack.c.l.b16 %v823
    %v1060 = vunpack.c.h.b16 %v823
    %v1061 = vunpack.c.l.b16 %v824
    %v1062 = vunpack.c.h.b16 %v824
    %v1063 = vunpack.c.l.b16 %v825
    %v1064 = vunpack.c.h.b16 %v825
    %v1065 = vunpack.c.l.b16 %v826
    %v1066 = vunpack.c.h.b16 %v826
    %v1067 = vunpack.c.l.b16 %v827
    %v1068 = vunpack.c.h.b16 %v827
    %v1069 = vunpack.c.l.b16 %v828
    %v1070 = vunpack.c.h.b16 %v828
    %v1071 = vunpack.c.l.b16 %v829
    %v1072 = vunpack.c.h.b16 %v829
    %v1073 = vunpack.c.l.b16 %v830
    %v1074 = vunpack.c.h.b16 %v830
    %v1075 = vunpack.c.l.b16 %v831
    %v1076 = vunpack.c.h.b16 %v831
    %v1077 = vunpack.c.l.b16 %v832
    %v1078 = vunpack.c.h.b16 %v832
    %v1079 = vunpack.c.l.b16 %v833
    %v1080 = vunpack.c.h.b16 %v833
    %v1081 = vunpack.c.l.b16 %v834
    %v1082 = vunpack.c.h.b16 %v834
    %v1083 = vunpack.c.l.b16 %v835
    %v1084 = vunpack.c.h.b16 %v835
    %v1085 = vunpack.c.l.b16 %v836
    %v1086 = vunpack.c.h.b16 %v836
    %v1087 = vunpack.c.l.b16 %v837
    %v1088 = vunpack.c.h.b16 %v837
    %v1089 = vunpack.c.l.b16 %v838
    %v1090 = vunpack.c.h.b16 %v838
    %v1091 = vunpack.c.l.b16 %v839
    %v1092 = vunpack.c.h.b16 %v839
    %v1093 = vunpack.c.l.b16 %v840
    %v1094 = vunpack.c.h.b16 %v840
    %v1095 = vunpack.c.l.b16 %v841
    %v1096 = vunpack.c.h.b16 %v841
    %v1097 = vunpack.c.l.b16 %v842
    %v1098 = vunpack.c.h.b16 %v842
    %v1099 = vunpack.c.l.b16 %v843
    %v1100 = vunpack.c.h.b16 %v843
    %v1101 = vunpack.c.l.b16 %v844
    %v1102 = vunpack.c.h.b16 %v844
    %v1103 = vunpack.c.l.b16 %v845
    %v1104 = vunpack.c.h.b16 %v845
    %v1105 = vunpack.c.l.b16 %v846
    %v1106 = vunpack.c.h.b16 %v846
    %v1107 = vunpack.c.l.b16 %v847
    %v1108 = vunpack.c.h.b16 %v847
    %v1109 = vunpack.c.l.b16 %v848
    %v1110 = vunpack.c.h.b16 %v848
    %v1111 = vunpack.c.l.b16 %v849
    %v1112 = vunpack.c.h.b16 %v849
    %v1113 = vunpack.c.l.b16 %v850
    %v1114 = vunpack.c.h.b16 %v850
    %v1115 = vunpack.c.l.b16 %v851
    %v1116 = vunpack.c.h.b16 %v851
    %v1117 = vunpack.c.l.b16 %v852
    %v1118 = vunpack.c.h.b16 %v852
    %v1119 = vunpack.c.l.b16 %v853
    %v1120 = vunpack.c.h.b16 %v853
    %v1121 = vunpack.c.l.b16 %v854
    %v1122 = vunpack.c.h.b16 %v854
    %v1123 = vunpack.c.l.b16 %v855
    %v1124 = vunpack.c.h.b16 %v855
    %v1125 = vunpack.c.l.b16 %v856
    %v1126 = vunpack.c.h.b16 %v856
    %v1127 = vunpack.c.l.b16 %v857
    %v1128 = vunpack.c.h.b16 %v857
    %v1129 = vunpack.c.l.b16 %v858
    %v1130 = vunpack.c.h.b16 %v858
    %v1131 = vunpack.c.l.b16 %v859
    %v1132 = vunpack.c.h.b16 %v859
    %v1133 = vunpack.c.l.b16 %v860
    %v1134 = vunpack.c.h.b16 %v860
    %v1135 = vunpack.c.l.b16 %v861
    %v1136 = vunpack.c.h.b16 %v861
    %v1137 = vunpack.c.l.b16 %v862
    %v1138 = vunpack.c.h.b16 %v862
    %v1139 = vunpack.c.l.b16 %v863
    %v1140 = vunpack.c.h.b16 %v863
    %v1141 = vunpack.c.l.b16 %v864
    %v1142 = vunpack.c.h.b16 %v864
    %v1143 = vunpack.c.l.b16 %v865
    %v1144 = vunpack.c.h.b16 %v865
    %v1145 = vunpack.c.l.b16 %v866
    %v1146 = vunpack.c.h.b16 %v866
    %v1147 = vunpack.c.l.b16 %v867
    %v1148 = vunpack.c.h.b16 %v867
    %v1149 = vunpack.c.l.b16 %v868
    %v1150 = vunpack.c.h.b16 %v868
    %v1151 = vunpack.c.l.b16 %v869
    %v1152 = vunpack.c.h.b16 %v869
    %v1153 = vunpack.c.l.b16 %v870
    %v1154 = vunpack.c.h.b16 %v870
    %v1155 = vunpack.c.l.b16 %v871
    %v1156 = vunpack.c.h.b16 %v871
    %v1157 = vunpack.c.l.b16 %v872
    %v1158 = vunpack.c.h.b16 %v872
    %v1159 = vunpack.c.l.b16 %v873
    %v1160 = vunpack.c.h.b16 %v873
    %v1161 = vunpack.c.l.b16 %v874
    %v1162 = vunpack.c.h.b16 %v874
    %v1163 = vpack.c.b16 %v973, %v971
    %v1164 = vpack.c.b16 %v974, %v972
    %v1165 = vpack.c.b16 %v977, %v975
    %v1166 = vpack.c.b16 %v978, %v976
    %v1167 = vpack.c.b16 %v981, %v979
    %v1168 = vpack.c.b16 %v982, %v980
    %v1169 = vpack.c.b16 %v985, %v983
    %v1170 = vpack.c.b16 %v986, %v984
    %v1171 = vpack.c.b16 %v989, %v987
    %v1172 = vpack.c.b16 %v990, %v988
    %v1173 = vpack.c.b16 %v993, %v991
    %v1174 = vpack.c.b16 %v994, %v992
    %v1175 = vpack.c.b16 %v997, %v995
    %v1176 = vpack.c.b16 %v998, %v996
    %v1177 = vpack.c.b16 %v1001, %v999
    %v1178 = vpack.c.b16 %v1002, %v1000
    %v1179 = vpack.c.b16 %v1005, %v1003
    %v1180 = vpack.c.b16 %v1006, %v1004
    %v1181 = vpack.c.b16 %v1009, %v1007
    %v1182 = vpack.c.b16 %v1010, %v1008
    %v1183 = vpack.c.b16 %v1013, %v1011
    %v1184 = vpack.c.b16 %v1014, %v1012
    %v1185 = vpack.c.b16 %v1017, %v1015
    %v1186 = vpack.c.b16 %v1018, %v1016
    %v1187 = vpack.c.b16 %v1021, %v1019
    %v1188 = vpack.c.b16 %v1022, %v1020
    %v1189 = vpack.c.b16 %v1025, %v1023
    %v1190 = vpack.c.b16 %v1026, %v1024
    %v1191 = vpack.c.b16 %v1029, %v1027
    %v1192 = vpack.c.b16 %v1030, %v1028
    %v1193 = vpack.c.b16 %v1033, %v1031
    %v1194 = vpack.c.b16 %v1034, %v1032
    %v1195 = vpack.c.b16 %v1037, %v1035
    %v1196 = vpack.c.b16 %v1038, %v1036
    %v1197 = vpack.c.b16 %v1041, %v1039
    %v1198 = vpack.c.b16 %v1042, %v1040
    %v1199 = vpack.c.b16 %v1045, %v1043
    %v1200 = vpack.c.b16 %v1046, %v1044
    %v1201 = vpack.c.b16 %v1049, %v1047
    %v1202 = vpack.c.b16 %v1050, %v1048
    %v1203 = vpack.c.b16 %v1053, %v1051
    %v1204 = vpack.c.b16 %v1054, %v1052
    %v1205 = vpack.c.b16 %v1057, %v1055
    %v1206 = vpack.c.b16 %v1058, %v1056
    %v1207 = vpack.c.b16 %v1061, %v1059
    %v1208 = vpack.c.b16 %v1062, %v1060
    %v1209 = vpack.c.b16 %v1065, %v1063
    %v1210 = vpack.c.b16 %v1066, %v1064
    %v1211 = vpack.c.b16 %v1069, %v1067
    %v1212 = vpack.c.b16 %v1070, %v1068
    %v1213 = vpack.c.b16 %v1073, %v1071
    %v1214 = vpack.c.b16 %v1074, %v1072
    %v1215 = vpack.c.b16 %v1077, %v1075
    %v1216 = vpack.c.b16 %v1078, %v1076
    %v1217 = vpack.c.b16 %v1081, %v1079
    %v1218 = vpack.c.b16 %v1082, %v1080
    %v1219 = vpack.c.b16 %v1085, %v1083
    %v1220 = vpack.c.b16 %v1086, %v1084
    %v1221 = vpack.c.b16 %v1089, %v1087
    %v1222 = vpack.c.b16 %v1090, %v1088
    %v1223 = vpack.c.b16 %v1093, %v1091
    %v1224 = vpack.c.b16 %v1094, %v1092
    %v1225 = vpack.c.b16 %v1097, %v1095
    %v1226 = vpack.c.b16 %v1098, %v1096
    %v1227 = vpack.c.b16 %v1101, %v1099
    %v1228 = vpack.c.b16 %v1102, %v1100
    %v1229 = vpack.c.b16 %v1105, %v1103
    %v1230 = vpack.c.b16 %v1106, %v1104
    %v1231 = vpack.c.b16 %v1109, %v1107
    %v1232 = vpack.c.b16 %v1110, %v1108
    %v1233 = vpack.c.b16 %v1113, %v1111
    %v1234 = vpack.c.b16 %v1114, %v1112
    %v1235 = vpack.c.b16 %v1117, %v1115
    %v1236 = vpack.c.b16 %v1118, %v1116
    %v1237 = vpack.c.b16 %v1121, %v1119
    %v1238 = vpack.c.b16 %v1122, %v1120
    %v1239 = vpack.c.b16 %v1125, %v1123
    %v1240 = vpack.c.b16 %v1126, %v1124
    %v1241 = vpack.c.b16 %v1129, %v1127
    %v1242 = vpack.c.b16 %v1130, %v1128
    %v1243 = vpack.c.b16 %v1133, %v1131
    %v1244 = vpack.c.b16 %v1134, %v1132
    %v1245 = vpack.c.b16 %v1137, %v1135
    %v1246 = vpack.c.b16 %v1138, %v1136
    %v1247 = vpack.c.b16 %v1141, %v1139
    %v1248 = vpack.c.b16 %v1142, %v1140
    %v1249 = vpack.c.b16 %v1145, %v1143
    %v1250 = vpack.c.b16 %v1146, %v1144
    %v1251 = vpack.c.b16 %v1149, %v1147
    %v1252 = vpack.c.b16 %v1150, %v1148
    %v1253 = vpack.c.b16 %v1153, %v1151
    %v1254 = vpack.c.b16 %v1154, %v1152
    %v1255 = vpack.c.b16 %v1157, %v1155
    %v1256 = vpack.c.b16 %v1158, %v1156
    %v1257 = vpack.c.b16 %v1161, %v1159
    %v1258 = vpack.c.b16 %v1162, %v1160
    %1355 = vmatprep.subr.bf16.mxu0 %v1164
    %1356 = vmatpush1.bf16.msra.mxu0 %v1163
    %1357 = vmatprep.subr.bf16.mxu0 %v1166
    %1358 = vmatpush1.bf16.msra.mxu0 %v1165
    %1359 = vmatprep.subr.bf16.mxu0 %v1168
    %1360 = vmatpush1.bf16.msra.mxu0 %v1167
    %1361 = vmatprep.subr.bf16.mxu0 %v1170
    %1362 = vmatpush1.bf16.msra.mxu0 %v1169
    %1363 = vmatprep.subr.bf16.mxu0 %v1172
    %1364 = vmatpush1.bf16.msra.mxu0 %v1171
    %1365 = vmatprep.subr.bf16.mxu0 %v1174
    %1366 = vmatpush1.bf16.msra.mxu0 %v1173
    %1367 = vmatprep.subr.bf16.mxu0 %v1176
    %1368 = vmatpush1.bf16.msra.mxu0 %v1175
    %1369 = vmatprep.subr.bf16.mxu0 %v1178
    %1370 = vmatpush1.bf16.msra.mxu0 %v1177
    %1371 = vmatprep.subr.bf16.mxu0 %v1180
    %1372 = vmatpush1.bf16.msra.mxu0 %v1179
    %1373 = vmatprep.subr.bf16.mxu0 %v1182
    %1374 = vmatpush1.bf16.msra.mxu0 %v1181
    %1375 = vmatprep.subr.bf16.mxu0 %v1184
    %1376 = vmatpush1.bf16.msra.mxu0 %v1183
    %1377 = vmatprep.subr.bf16.mxu0 %v1186
    %1378 = vmatpush1.bf16.msra.mxu0 %v1185
    %1379 = vmatprep.subr.bf16.mxu0 %v1188
    %1380 = vmatpush1.bf16.msra.mxu0 %v1187
    %1381 = vmatprep.subr.bf16.mxu0 %v1190
    %1382 = vmatpush1.bf16.msra.mxu0 %v1189
    %1383 = vmatprep.subr.bf16.mxu0 %v1192
    %1384 = vmatpush1.bf16.msra.mxu0 %v1191
    %1385 = vmatprep.subr.bf16.mxu0 %v1194
    %1386 = vmatpush1.bf16.msra.mxu0 %v1193
    %1387 = vmatprep.mubr.bf16.mxu0 %v768
    %1388 = vmatmul.mubr.bf16.gmra.mrb[0].mxu0 %v767
    %v1389 = vpop.f32.mrb[0].mxu0
    %v1390 = vadd.f32 0.0, %v1389
    %v1391 = vpop.f32.mrb[0].mxu0
    %v1392 = vadd.f32 0.0, %v1391
    %v1393 = vpop.f32.mrb[0].mxu0
    %v1394 = vadd.f32 0.0, %v1393
    %v1395 = vpop.f32.mrb[0].mxu0
    %v1396 = vadd.f32 0.0, %v1395
    %1397 = vmatprep.mubr.bf16.mxu0 %v774
    %1398 = vmatmul.mubr.bf16.gmra.mrb[0].mxu0 %v773
    %v1399 = vpop.f32.mrb[0].mxu0
    %v1400 = vadd.f32 0.0, %v1399
    %v1401 = vpop.f32.mrb[0].mxu0
    %v1402 = vadd.f32 0.0, %v1401
    %v1403 = vpop.f32.mrb[0].mxu0
    %v1404 = vadd.f32 0.0, %v1403
    %v1405 = vpop.f32.mrb[0].mxu0
    %v1406 = vadd.f32 0.0, %v1405
    %1407 = vdwg.mxu0
    %1408 = vmatprep.subr.bf16.mxu0 %v1196
    %1409 = vmatpush1.bf16.msra.mxu0 %v1195
    %1410 = vmatprep.subr.bf16.mxu0 %v1198
    %1411 = vmatpush1.bf16.msra.mxu0 %v1197
    %1412 = vmatprep.subr.bf16.mxu0 %v1200
    %1413 = vmatpush1.bf16.msra.mxu0 %v1199
    %1414 = vmatprep.subr.bf16.mxu0 %v1202
    %1415 = vmatpush1.bf16.msra.mxu0 %v1201
    %1416 = vmatprep.subr.bf16.mxu0 %v1204
    %1417 = vmatpush1.bf16.msra.mxu0 %v1203
    %1418 = vmatprep.subr.bf16.mxu0 %v1206
    %1419 = vmatpush1.bf16.msra.mxu0 %v1205
    %1420 = vmatprep.subr.bf16.mxu0 %v1208
    %1421 = vmatpush1.bf16.msra.mxu0 %v1207
    %1422 = vmatprep.subr.bf16.mxu0 %v1210
    %1423 = vmatpush1.bf16.msra.mxu0 %v1209
    %1424 = vmatprep.subr.bf16.mxu0 %v1212
    %1425 = vmatpush1.bf16.msra.mxu0 %v1211
    %1426 = vmatprep.subr.bf16.mxu0 %v1214
    %1427 = vmatpush1.bf16.msra.mxu0 %v1213
    %1428 = vmatprep.subr.bf16.mxu0 %v1216
    %1429 = vmatpush1.bf16.msra.mxu0 %v1215
    %1430 = vmatprep.subr.bf16.mxu0 %v1218
    %1431 = vmatpush1.bf16.msra.mxu0 %v1217
    %1432 = vmatprep.subr.bf16.mxu0 %v1220
    %1433 = vmatpush1.bf16.msra.mxu0 %v1219
    %1434 = vmatprep.subr.bf16.mxu0 %v1222
    %1435 = vmatpush1.bf16.msra.mxu0 %v1221
    %1436 = vmatprep.subr.bf16.mxu0 %v1224
    %1437 = vmatpush1.bf16.msra.mxu0 %v1223
    %1438 = vmatprep.subr.bf16.mxu0 %v1226
    %1439 = vmatpush1.bf16.msra.mxu0 %v1225
    %1440 = vmatprep.mubr.bf16.mxu0 %v770
    %1441 = vmatmul.mubr.bf16.gmra.mrb[0].mxu0 %v769
    %v1442 = vpop.f32.mrb[0].mxu0
    %v1443 = vadd.f32 %v1390, %v1442
    %v1444 = vpop.f32.mrb[0].mxu0
    %v1445 = vadd.f32 %v1392, %v1444
    %v1446 = vpop.f32.mrb[0].mxu0
    %v1447 = vadd.f32 %v1394, %v1446
    %v1448 = vpop.f32.mrb[0].mxu0
    %v1449 = vadd.f32 %v1396, %v1448
    %1450 = vmatprep.mubr.bf16.mxu0 %v776
    %1451 = vmatmul.mubr.bf16.gmra.mrb[0].mxu0 %v775
    %v1452 = vpop.f32.mrb[0].mxu0
    %v1453 = vadd.f32 %v1400, %v1452
    %v1454 = vpop.f32.mrb[0].mxu0
    %v1455 = vadd.f32 %v1402, %v1454
    %v1456 = vpop.f32.mrb[0].mxu0
    %v1457 = vadd.f32 %v1404, %v1456
    %v1458 = vpop.f32.mrb[0].mxu0
    %v1459 = vadd.f32 %v1406, %v1458
    %1460 = vdwg.mxu0
    %1461 = vmatprep.subr.bf16.mxu0 %v1228
    %1462 = vmatpush1.bf16.msra.mxu0 %v1227
    %1463 = vmatprep.subr.bf16.mxu0 %v1230
    %1464 = vmatpush1.bf16.msra.mxu0 %v1229
    %1465 = vmatprep.subr.bf16.mxu0 %v1232
    %1466 = vmatpush1.bf16.msra.mxu0 %v1231
    %1467 = vmatprep.subr.bf16.mxu0 %v1234
    %1468 = vmatpush1.bf16.msra.mxu0 %v1233
    %1469 = vmatprep.subr.bf16.mxu0 %v1236
    %1470 = vmatpush1.bf16.msra.mxu0 %v1235
    %1471 = vmatprep.subr.bf16.mxu0 %v1238
    %1472 = vmatpush1.bf16.msra.mxu0 %v1237
    %1473 = vmatprep.subr.bf16.mxu0 %v1240
    %1474 = vmatpush1.bf16.msra.mxu0 %v1239
    %1475 = vmatprep.subr.bf16.mxu0 %v1242
    %1476 = vmatpush1.bf16.msra.mxu0 %v1241
    %1477 = vmatprep.subr.bf16.mxu0 %v1244
    %1478 = vmatpush1.bf16.msra.mxu0 %v1243
    %1479 = vmatprep.subr.bf16.mxu0 %v1246
    %1480 = vmatpush1.bf16.msra.mxu0 %v1245
    %1481 = vmatprep.subr.bf16.mxu0 %v1248
    %1482 = vmatpush1.bf16.msra.mxu0 %v1247
    %1483 = vmatprep.subr.bf16.mxu0 %v1250
    %1484 = vmatpush1.bf16.msra.mxu0 %v1249
    %1485 = vmatprep.subr.bf16.mxu0 %v1252
    %1486 = vmatpush1.bf16.msra.mxu0 %v1251
    %1487 = vmatprep.subr.bf16.mxu0 %v1254
    %1488 = vmatpush1.bf16.msra.mxu0 %v1253
    %1489 = vmatprep.subr.bf16.mxu0 %v1256
    %1490 = vmatpush1.bf16.msra.mxu0 %v1255
    %1491 = vmatprep.subr.bf16.mxu0 %v1258
    %1492 = vmatpush1.bf16.msra.mxu0 %v1257
    %1493 = vmatprep.mubr.bf16.mxu0 %v772
    %1494 = vmatmul.mubr.bf16.gmra.mrb[0].mxu0 %v771
    %v1495 = vpop.f32.mrb[0].mxu0
    %v1496 = vadd.f32 %v1443, %v1495
    %v1497 = vpop.f32.mrb[0].mxu0
    %v1498 = vadd.f32 %v1445, %v1497
    %v1499 = vpop.f32.mrb[0].mxu0
    %v1500 = vadd.f32 %v1447, %v1499
    %v1501 = vpop.f32.mrb[0].mxu0
    %v1502 = vadd.f32 %v1449, %v1501
    %1503 = vmatprep.mubr.bf16.mxu0 %v778
    %1504 = vmatmul.mubr.bf16.gmra.mrb[0].mxu0 %v777
    %v1505 = vpop.f32.mrb[0].mxu0
    %v1506 = vadd.f32 %v1453, %v1505
    %v1507 = vpop.f32.mrb[0].mxu0
    %v1508 = vadd.f32 %v1455, %v1507
    %v1509 = vpop.f32.mrb[0].mxu0
    %v1510 = vadd.f32 %v1457, %v1509
    %v1511 = vpop.f32.mrb[0].mxu0
    %v1512 = vadd.f32 %v1459, %v1511
    %1513 = vdwg.mxu0
    %v1514 = vld [vmem:[%s3] ss:$4 sm:$0x3]
    %s1515 = scalar_lea.vmem %s3, 1
    %v1516 = vld [vmem:[%s1515] ss:$4 sm:$0x3]
    %v1517 = vmul.f32 %v1496, %v106
    %v1518 = vmul.f32 %v1498, %v106
    %v1519 = vmul.f32 %v1500, %v107
    %v1520 = vmul.f32 %v1502, %v107
    %v1521 = vmul.f32 %v1506, %v108
    %v1522 = vmul.f32 %v1508, %v108
    %v1523 = vmul.f32 %v1510, %v109
    %v1524 = vmul.f32 %v1512, %v109
    %v1525 = vadd.f32 %v1517, %v1519
    %v1526 = vadd.f32 %v1525, %v1521
    %v1527 = vadd.f32 %v1526, %v1523
    %v1528 = vrot.slane %v1527, 4
    %v1529 = vadd.f32 %v1527, %v1528
    %v1530 = vrot.slane %v1529, 2
    %v1531 = vadd.f32 %v1529, %v1530
    %v1532 = vrot.slane %v1531, 1
    %v1533 = vadd.f32 %v1531, %v1532
    %v1534 = vadd.f32 %v1518, %v1520
    %v1535 = vadd.f32 %v1534, %v1522
    %v1536 = vadd.f32 %v1535, %v1524
    %v1537 = vrot.slane %v1536, 4
    %v1538 = vadd.f32 %v1536, %v1537
    %v1539 = vrot.slane %v1538, 2
    %v1540 = vadd.f32 %v1538, %v1539
    %v1541 = vrot.slane %v1540, 1
    %v1542 = vadd.f32 %v1540, %v1541
    %1543 = vmatprep.subr.mxu0 %v614
    %1544 = vmatpush1.msra.mxu0 %v613
    %1545 = vmatprep.subr.mxu0 %v616
    %1546 = vmatpush1.msra.mxu0 %v615
    %1547 = vmatprep.subr.mxu0 %v618
    %1548 = vmatpush1.msra.mxu0 %v617
    %1549 = vmatprep.subr.mxu0 %v620
    %1550 = vmatpush1.msra.mxu0 %v619
    %1551 = vmatprep.subr.mxu0 %v622
    %1552 = vmatpush1.msra.mxu0 %v621
    %1553 = vmatprep.subr.mxu0 %v624
    %1554 = vmatpush1.msra.mxu0 %v623
    %1555 = vmatprep.subr.mxu0 %v626
    %1556 = vmatpush1.msra.mxu0 %v625
    %1557 = vmatprep.subr.mxu0 %v628
    %1558 = vmatpush1.msra.mxu0 %v627
    %1559 = vmatprep.subr.mxu0 %v630
    %1560 = vmatpush1.msra.mxu0 %v629
    %1561 = vmatprep.subr.mxu0 %v632
    %1562 = vmatpush1.msra.mxu0 %v631
    %1563 = vmatprep.subr.mxu0 %v634
    %1564 = vmatpush1.msra.mxu0 %v633
    %1565 = vmatprep.subr.mxu0 %v636
    %1566 = vmatpush1.msra.mxu0 %v635
    %1567 = vmatprep.subr.mxu0 %v638
    %1568 = vmatpush1.msra.mxu0 %v637
    %1569 = vmatprep.subr.mxu0 %v640
    %1570 = vmatpush1.msra.mxu0 %v639
    %1571 = vmatprep.subr.mxu0 %v642
    %1572 = vmatpush1.msra.mxu0 %v641
    %1573 = vmatprep.subr.mxu0 %v644
    %1574 = vmatpush1.msra.mxu0 %v643
    %1575 = vmatprep.subr.mxu0 %v646
    %1576 = vmatpush1.msra.mxu0 %v645
    %1577 = vmatprep.subr.mxu0 %v648
    %1578 = vmatpush1.msra.mxu0 %v647
    %1579 = vmatprep.subr.mxu0 %v650
    %1580 = vmatpush1.msra.mxu0 %v649
    %1581 = vmatprep.subr.mxu0 %v652
    %1582 = vmatpush1.msra.mxu0 %v651
    %1583 = vmatprep.subr.mxu0 %v654
    %1584 = vmatpush1.msra.mxu0 %v653
    %1585 = vmatprep.subr.mxu0 %v656
    %1586 = vmatpush1.msra.mxu0 %v655
    %1587 = vmatprep.subr.mxu0 %v658
    %1588 = vmatpush1.msra.mxu0 %v657
    %1589 = vmatprep.subr.mxu0 %v660
    %1590 = vmatpush1.msra.mxu0 %v659
    %1591 = vmatprep.subr.mxu0 %v662
    %1592 = vmatpush1.msra.mxu0 %v661
    %1593 = vmatprep.subr.mxu0 %v664
    %1594 = vmatpush1.msra.mxu0 %v663
    %1595 = vmatprep.subr.mxu0 %v666
    %1596 = vmatpush1.msra.mxu0 %v665
    %1597 = vmatprep.subr.mxu0 %v668
    %1598 = vmatpush1.msra.mxu0 %v667
    %1599 = vmatprep.subr.mxu0 %v670
    %1600 = vmatpush1.msra.mxu0 %v669
    %1601 = vmatprep.subr.mxu0 %v672
    %1602 = vmatpush1.msra.mxu0 %v671
    %1603 = vmatprep.subr.mxu0 %v674
    %1604 = vmatpush1.msra.mxu0 %v673
    %1605 = vmatprep.subr.mxu0 %v676
    %1606 = vmatpush1.msra.mxu0 %v675
    %1607 = vmatprep.mubr.f32.mxu0 %v1542
    %1608 = vmatmul.mubr.f32.gmra.mrb[0].mxu0 %v1533
    %v1609 = vpop.f32.mrb[0].mxu0
    %v1610 = vadd.f32 0.0, %v1609
    %v1611 = vpop.f32.mrb[0].mxu0
    %v1612 = vadd.f32 0.0, %v1611
    %1613 = vdwg.mxu0
    %v1614 = vmul.f32 %v1517, %v1496
    %v1615 = vmul.f32 %v1518, %v1498
    %v1616 = vmul.f32 %v1519, %v1500
    %v1617 = vmul.f32 %v1520, %v1502
    %v1618 = vmul.f32 %v1521, %v1506
    %v1619 = vmul.f32 %v1522, %v1508
    %v1620 = vmul.f32 %v1523, %v1510
    %v1621 = vmul.f32 %v1524, %v1512
    %v1622 = vadd.f32 %v1614, %v1616
    %v1623 = vadd.f32 %v1622, %v1618
    %v1624 = vadd.f32 %v1623, %v1620
    %v1625 = vrot.slane %v1624, 4
    %v1626 = vadd.f32 %v1624, %v1625
    %v1627 = vrot.slane %v1626, 2
    %v1628 = vadd.f32 %v1626, %v1627
    %v1629 = vrot.slane %v1628, 1
    %v1630 = vadd.f32 %v1628, %v1629
    %v1631 = vadd.f32 %v1615, %v1617
    %v1632 = vadd.f32 %v1631, %v1619
    %v1633 = vadd.f32 %v1632, %v1621
    %v1634 = vrot.slane %v1633, 4
    %v1635 = vadd.f32 %v1633, %v1634
    %v1636 = vrot.slane %v1635, 2
    %v1637 = vadd.f32 %v1635, %v1636
    %v1638 = vrot.slane %v1637, 1
    %v1639 = vadd.f32 %v1637, %v1638
    %1640 = vmatprep.subr.mxu0 %v614
    %1641 = vmatpush1.msra.mxu0 %v613
    %1642 = vmatprep.subr.mxu0 %v616
    %1643 = vmatpush1.msra.mxu0 %v615
    %1644 = vmatprep.subr.mxu0 %v618
    %1645 = vmatpush1.msra.mxu0 %v617
    %1646 = vmatprep.subr.mxu0 %v620
    %1647 = vmatpush1.msra.mxu0 %v619
    %1648 = vmatprep.subr.mxu0 %v622
    %1649 = vmatpush1.msra.mxu0 %v621
    %1650 = vmatprep.subr.mxu0 %v624
    %1651 = vmatpush1.msra.mxu0 %v623
    %1652 = vmatprep.subr.mxu0 %v626
    %1653 = vmatpush1.msra.mxu0 %v625
    %1654 = vmatprep.subr.mxu0 %v628
    %1655 = vmatpush1.msra.mxu0 %v627
    %1656 = vmatprep.subr.mxu0 %v630
    %1657 = vmatpush1.msra.mxu0 %v629
    %1658 = vmatprep.subr.mxu0 %v632
    %1659 = vmatpush1.msra.mxu0 %v631
    %1660 = vmatprep.subr.mxu0 %v634
    %1661 = vmatpush1.msra.mxu0 %v633
    %1662 = vmatprep.subr.mxu0 %v636
    %1663 = vmatpush1.msra.mxu0 %v635
    %1664 = vmatprep.subr.mxu0 %v638
    %1665 = vmatpush1.msra.mxu0 %v637
    %1666 = vmatprep.subr.mxu0 %v640
    %1667 = vmatpush1.msra.mxu0 %v639
    %1668 = vmatprep.subr.mxu0 %v642
    %1669 = vmatpush1.msra.mxu0 %v641
    %1670 = vmatprep.subr.mxu0 %v644
    %1671 = vmatpush1.msra.mxu0 %v643
    %1672 = vmatprep.subr.mxu0 %v646
    %1673 = vmatpush1.msra.mxu0 %v645
    %1674 = vmatprep.subr.mxu0 %v648
    %1675 = vmatpush1.msra.mxu0 %v647
    %1676 = vmatprep.subr.mxu0 %v650
    %1677 = vmatpush1.msra.mxu0 %v649
    %1678 = vmatprep.subr.mxu0 %v652
    %1679 = vmatpush1.msra.mxu0 %v651
    %1680 = vmatprep.subr.mxu0 %v654
    %1681 = vmatpush1.msra.mxu0 %v653
    %1682 = vmatprep.subr.mxu0 %v656
    %1683 = vmatpush1.msra.mxu0 %v655
    %1684 = vmatprep.subr.mxu0 %v658
    %1685 = vmatpush1.msra.mxu0 %v657
    %1686 = vmatprep.subr.mxu0 %v660
    %1687 = vmatpush1.msra.mxu0 %v659
    %1688 = vmatprep.subr.mxu0 %v662
    %1689 = vmatpush1.msra.mxu0 %v661
    %1690 = vmatprep.subr.mxu0 %v664
    %1691 = vmatpush1.msra.mxu0 %v663
    %1692 = vmatprep.subr.mxu0 %v666
    %1693 = vmatpush1.msra.mxu0 %v665
    %1694 = vmatprep.subr.mxu0 %v668
    %1695 = vmatpush1.msra.mxu0 %v667
    %1696 = vmatprep.subr.mxu0 %v670
    %1697 = vmatpush1.msra.mxu0 %v669
    %1698 = vmatprep.subr.mxu0 %v672
    %1699 = vmatpush1.msra.mxu0 %v671
    %1700 = vmatprep.subr.mxu0 %v674
    %1701 = vmatpush1.msra.mxu0 %v673
    %1702 = vmatprep.subr.mxu0 %v676
    %1703 = vmatpush1.msra.mxu0 %v675
    %1704 = vmatprep.mubr.f32.mxu0 %v1639
    %1705 = vmatmul.mubr.f32.gmra.mrb[0].mxu0 %v1630
    %v1706 = vpop.f32.mrb[0].mxu0
    %v1707 = vadd.f32 0.0, %v1706
    %v1708 = vpop.f32.mrb[0].mxu0
    %v1709 = vadd.f32 0.0, %v1708
    %1710 = vdwg.mxu0
    %v1711 = vmul.f32 %v1610, %v1610
    %v1712 = vmul.f32 %v1612, %v1612
    %v1713 = vsub.f32 %v1707, %v1711
    %v1714 = vsub.f32 %v1709, %v1712
    %v1715 = vadd.f32 %v1713, 1e-05
    %v1716 = vadd.f32 %v1714, 1e-05
    %v1717 = vrsqrt.pop %v1715
    %v1718 = vrsqrt.pop %v1716
    %v1721 = vcombine.low %v1717, %v1718
    %v1723 = vunpack.c.l.s4 1966171168
    %v1724 = vunpack.c.0.s8 %v1723
    %v1725 = vlaneseq
    %v1726 = vshrl.u32 %v1725, 7
    %v1727 = vsub.s32 %v1724, %v1726
    %v1728 = vrot.slane %v1721, %v1727
    %v1730 = vunpack.c.l.s4 1966171168
    %v1731 = vunpack.c.0.s8 %v1730
    %v1732 = vlaneseq
    %v1733 = vshrl.u32 %v1732, 7
    %v1734 = vsub.s32 %v1731, %v1733
    %v1735 = vrot.slane %v1728, %v1734
    %v1737 = vmul.f32 %v1514, %v1735
    %v1739 = vlaneseq
    %v1740 = vshrl.u32 %v1739, 7
    %v1741 = vsub.s32 0, %v1740
    %v1742 = vrot.slane %v1737, %v1741
    %v1743 = vlaneseq
    %v1744 = vshrl.u32 %v1743, 7
    %v1745 = vsub.s32 1, %v1744
    %v1746 = vrot.slane %v1737, %v1745
    %v1749 = vmul.f32 %v1610, %v1742
    %v1750 = vmul.f32 %v1612, %v1746
    %v1753 = vcombine.low %v1749, %v1750
    %v1755 = vunpack.c.l.s4 1966171168
    %v1756 = vunpack.c.0.s8 %v1755
    %v1757 = vlaneseq
    %v1758 = vshrl.u32 %v1757, 7
    %v1759 = vsub.s32 %v1756, %v1758
    %v1760 = vrot.slane %v1753, %v1759
    %v1762 = vunpack.c.l.s4 1966171168
    %v1763 = vunpack.c.0.s8 %v1762
    %v1764 = vlaneseq
    %v1765 = vshrl.u32 %v1764, 7
    %v1766 = vsub.s32 %v1763, %v1765
    %v1767 = vrot.slane %v1760, %v1766
    %v1769 = vsub.f32 %v1516, %v1767
    %v1770 = vmul.f32 %v1496, %v1742
    %v1771 = vmul.f32 %v1498, %v1746
    %v1772 = vmul.f32 %v1500, %v1742
    %v1773 = vmul.f32 %v1502, %v1746
    %v1774 = vmul.f32 %v1506, %v1742
    %v1775 = vmul.f32 %v1508, %v1746
    %v1776 = vmul.f32 %v1510, %v1742
    %v1777 = vmul.f32 %v1512, %v1746
    %v1779 = vlaneseq
    %v1780 = vshrl.u32 %v1779, 7
    %v1781 = vsub.s32 0, %v1780
    %v1782 = vrot.slane %v1769, %v1781
    %v1783 = vlaneseq
    %v1784 = vshrl.u32 %v1783, 7
    %v1785 = vsub.s32 1, %v1784
    %v1786 = vrot.slane %v1769, %v1785
    %v1789 = vadd.f32 %v1770, %v1782
    %v1790 = vadd.f32 %v1771, %v1786
    %v1791 = vadd.f32 %v1772, %v1782
    %v1792 = vadd.f32 %v1773, %v1786
    %v1793 = vadd.f32 %v1774, %v1782
    %v1794 = vadd.f32 %v1775, %v1786
    %v1795 = vadd.f32 %v1776, %v1782
    %v1796 = vadd.f32 %v1777, %v1786
    %v1797 = vmax.f32 %v1789, 0.0
    %v1798 = vmax.f32 %v1790, 0.0
    %v1799 = vmax.f32 %v1791, 0.0
    %v1800 = vmax.f32 %v1792, 0.0
    %v1801 = vmax.f32 %v1793, 0.0
    %v1802 = vmax.f32 %v1794, 0.0
    %v1803 = vmax.f32 %v1795, 0.0
    %v1804 = vmax.f32 %v1796, 0.0
    %v1805 = vmul.f32 %v1797, %v106
    %v1806 = vmul.f32 %v1798, %v106
    %v1807 = vmul.f32 %v1799, %v107
    %v1808 = vmul.f32 %v1800, %v107
    %v1809 = vmul.f32 %v1801, %v108
    %v1810 = vmul.f32 %v1802, %v108
    %v1811 = vmul.f32 %v1803, %v109
    %v1812 = vmul.f32 %v1804, %v109
    %1813 = vst [vmem:[#allocation2] sm:$0xff] 0.0
    %1814 = vst [vmem:[#allocation2 + $0x8] sm:$0xff] 0.0
    %1815 = vst [vmem:[#allocation2 + $0x50] sm:$0xff] 0.0
    %1816 = vst [vmem:[#allocation2 + $0x58] sm:$0xff] 0.0
    %1817 = vst [vmem:[#allocation2 + $0x10] sm:$0xff] %v1805
    %1818 = vst [vmem:[#allocation2 + $0x18] sm:$0xff] %v1806
    %1819 = vst [vmem:[#allocation2 + $0x20] sm:$0xff] %v1807
    %1820 = vst [vmem:[#allocation2 + $0x28] sm:$0xff] %v1808
    %1821 = vst [vmem:[#allocation2 + $0x30] sm:$0xff] %v1809
    %1822 = vst [vmem:[#allocation2 + $0x38] sm:$0xff] %v1810
    %1823 = vst [vmem:[#allocation2 + $0x40] sm:$0xff] %v1811
    %1824 = vst [vmem:[#allocation2 + $0x48] sm:$0xff] %v1812
    %v1825 = vld [vmem:[#allocation2] sm:$0x80]
    %v1826 = vld [vmem:[#allocation2 + $0x8] sm:$0x80]
    %v1827 = vld [vmem:[#allocation2 + $0x10] sm:$0xff]
    %v1828 = vld [vmem:[#allocation2 + $0x18] sm:$0xff]
    %v1829 = vld [vmem:[#allocation2 + $0x20] sm:$0xff]
    %v1830 = vld [vmem:[#allocation2 + $0x28] sm:$0xff]
    %v1831 = vld [vmem:[#allocation2 + $0x30] sm:$0xff]
    %v1832 = vld [vmem:[#allocation2 + $0x38] sm:$0xff]
    %v1833 = vld [vmem:[#allocation2 + $0x40] sm:$0x7f]
    %v1834 = vld [vmem:[#allocation2 + $0x48] sm:$0x7f]
    %v1835 = vld [vmem:[#allocation2 + $0x10] sm:$0xfe]
    %v1836 = vld [vmem:[#allocation2 + $0x18] sm:$0xfe]
    %v1837 = vld [vmem:[#allocation2 + $0x20] sm:$0xff]
    %v1838 = vld [vmem:[#allocation2 + $0x28] sm:$0xff]
    %v1839 = vld [vmem:[#allocation2 + $0x30] sm:$0xff]
    %v1840 = vld [vmem:[#allocation2 + $0x38] sm:$0xff]
    %v1841 = vld [vmem:[#allocation2 + $0x40] sm:$0xff]
    %v1842 = vld [vmem:[#allocation2 + $0x48] sm:$0xff]
    %v1843 = vld [vmem:[#allocation2 + $0x50] sm:$0x1]
    %v1844 = vld [vmem:[#allocation2 + $0x58] sm:$0x1]
    %v1853 = vrot.slane %v1805, 1
    %v1854 = vrot.slane %v1806, 1
    %v1855 = vrot.slane %v1807, 1
    %v1856 = vsel %vm709, %v1853, %v1855
    %v1857 = vrot.slane %v1808, 1
    %v1858 = vsel %vm709, %v1854, %v1857
    %v1859 = vrot.slane %v1809, 1
    %v1860 = vsel %vm709, %v1855, %v1859
    %v1861 = vrot.slane %v1810, 1
    %v1862 = vsel %vm709, %v1857, %v1861
    %v1863 = vrot.slane %v1811, 1
    %v1864 = vsel %vm709, %v1859, %v1863
    %v1865 = vrot.slane %v1812, 1
    %v1866 = vsel %vm709, %v1861, %v1865
    %v1887 = vrot.slane %v1835, 2
    %v1888 = vrot.slane %v1836, 2
    %v1889 = vrot.slane %v1837, 2
    %v1890 = vsel %vm740, %v1887, %v1889
    %v1891 = vrot.slane %v1838, 2
    %v1892 = vsel %vm740, %v1888, %v1891
    %v1893 = vrot.slane %v1839, 2
    %v1894 = vsel %vm740, %v1889, %v1893
    %v1895 = vrot.slane %v1840, 2
    %v1896 = vsel %vm740, %v1891, %v1895
    %v1897 = vrot.slane %v1841, 2
    %v1898 = vsel %vm740, %v1893, %v1897
    %v1899 = vrot.slane %v1842, 2
    %v1900 = vsel %vm740, %v1895, %v1899
    %v1901 = vrot.slane %v1843, 2
    %v1902 = vsel %vm740, %v1897, %v1901
    %v1903 = vrot.slane %v1844, 2
    %v1904 = vsel %vm740, %v1899, %v1903
    %v1915 = vpack.c.bf16 %v1827, %v1825
    %v1916 = vpack.c.bf16 %v1828, %v1826
    %v1917 = vpack.c.bf16 %v1856, %v1853
    %v1918 = vpack.c.bf16 %v1858, %v1854
    %v1919 = vpack.c.bf16 %v1890, %v1887
    %v1920 = vpack.c.bf16 %v1892, %v1888
    %v1921 = vpack.c.bf16 %v1831, %v1829
    %v1922 = vpack.c.bf16 %v1832, %v1830
    %v1923 = vpack.c.bf16 %v1864, %v1860
    %v1924 = vpack.c.bf16 %v1866, %v1862
    %v1925 = vpack.c.bf16 %v1898, %v1894
    %v1926 = vpack.c.bf16 %v1900, %v1896
    %v1927 = vpack.c.bf16 %v1833, %v1833
    %v1928 = vpack.c.bf16 %v1834, %v1834
    %v1929 = vpack.c.bf16 %v1863, %v1863
    %v1930 = vpack.c.bf16 %v1865, %v1865
    %v1931 = vpack.c.bf16 %v1902, %v1902
    %v1932 = vpack.c.bf16 %v1904, %v1904
    %v1933 = vld [vmem:[#allocation5] sm:$0xff]
    %v1934 = vld [vmem:[#allocation5 + $0x8] sm:$0xff]
    %v1935 = vld [vmem:[#allocation5 + $0x10] sm:$0xff]
    %v1936 = vld [vmem:[#allocation5 + $0x18] sm:$0xff]
    %v1937 = vld [vmem:[#allocation5 + $0x20] sm:$0xff]
    %v1938 = vld [vmem:[#allocation5 + $0x28] sm:$0xff]
    %v1939 = vld [vmem:[#allocation5 + $0x30] sm:$0xff]
    %v1940 = vld [vmem:[#allocation5 + $0x38] sm:$0xff]
    %v1941 = vld [vmem:[#allocation5 + $0x40] sm:$0xff]
    %v1942 = vld [vmem:[#allocation5 + $0x48] sm:$0xff]
    %v1943 = vld [vmem:[#allocation5 + $0x50] sm:$0xff]
    %v1944 = vld [vmem:[#allocation5 + $0x58] sm:$0xff]
    %v1945 = vld [vmem:[#allocation5 + $0x60] sm:$0xff]
    %v1946 = vld [vmem:[#allocation5 + $0x68] sm:$0xff]
    %v1947 = vld [vmem:[#allocation5 + $0x70] sm:$0xff]
    %v1948 = vld [vmem:[#allocation5 + $0x78] sm:$0xff]
    %v1949 = vld [vmem:[#allocation5 + $0x80] sm:$0xff]
    %v1950 = vld [vmem:[#allocation5 + $0x88] sm:$0xff]
    %v1951 = vld [vmem:[#allocation5 + $0x90] sm:$0xff]
    %v1952 = vld [vmem:[#allocation5 + $0x98] sm:$0xff]
    %v1953 = vld [vmem:[#allocation5 + $0xa0] sm:$0xff]
    %v1954 = vld [vmem:[#allocation5 + $0xa8] sm:$0xff]
    %v1955 = vld [vmem:[#allocation5 + $0xb0] sm:$0xff]
    %v1956 = vld [vmem:[#allocation5 + $0xb8] sm:$0xff]
    %v1957 = vld [vmem:[#allocation5 + $0xc0] sm:$0xff]
    %v1958 = vld [vmem:[#allocation5 + $0xc8] sm:$0xff]
    %v1959 = vld [vmem:[#allocation5 + $0xd0] sm:$0xff]
    %v1960 = vld [vmem:[#allocation5 + $0xd8] sm:$0xff]
    %v1961 = vld [vmem:[#allocation5 + $0xe0] sm:$0xff]
    %v1962 = vld [vmem:[#allocation5 + $0xe8] sm:$0xff]
    %v1963 = vld [vmem:[#allocation5 + $0xf0] sm:$0xff]
    %v1964 = vld [vmem:[#allocation5 + $0xf8] sm:$0xff]
    %v1965 = vld [vmem:[#allocation5 + $0x100] sm:$0xff]
    %v1966 = vld [vmem:[#allocation5 + $0x108] sm:$0xff]
    %v1967 = vld [vmem:[#allocation5 + $0x110] sm:$0xff]
    %v1968 = vld [vmem:[#allocation5 + $0x118] sm:$0xff]
    %v1969 = vld [vmem:[#allocation5 + $0x120] sm:$0xff]
    %v1970 = vld [vmem:[#allocation5 + $0x128] sm:$0xff]
    %v1971 = vld [vmem:[#allocation5 + $0x130] sm:$0xff]
    %v1972 = vld [vmem:[#allocation5 + $0x138] sm:$0xff]
    %v1973 = vld [vmem:[#allocation5 + $0x140] sm:$0xff]
    %v1974 = vld [vmem:[#allocation5 + $0x148] sm:$0xff]
    %v1975 = vld [vmem:[#allocation5 + $0x150] sm:$0xff]
    %v1976 = vld [vmem:[#allocation5 + $0x158] sm:$0xff]
    %v1977 = vld [vmem:[#allocation5 + $0x160] sm:$0xff]
    %v1978 = vld [vmem:[#allocation5 + $0x168] sm:$0xff]
    %v1979 = vld [vmem:[#allocation5 + $0x170] sm:$0xff]
    %v1980 = vld [vmem:[#allocation5 + $0x178] sm:$0xff]
    %v1981 = vld [vmem:[#allocation5 + $0x180] sm:$0xff]
    %v1982 = vld [vmem:[#allocation5 + $0x188] sm:$0xff]
    %v1983 = vld [vmem:[#allocation5 + $0x190] sm:$0xff]
    %v1984 = vld [vmem:[#allocation5 + $0x198] sm:$0xff]
    %v1985 = vld [vmem:[#allocation5 + $0x1a0] sm:$0xff]
    %v1986 = vld [vmem:[#allocation5 + $0x1a8] sm:$0xff]
    %v1987 = vld [vmem:[#allocation5 + $0x1b0] sm:$0xff]
    %v1988 = vld [vmem:[#allocation5 + $0x1b8] sm:$0xff]
    %v1989 = vld [vmem:[#allocation5 + $0x1c0] sm:$0xff]
    %v1990 = vld [vmem:[#allocation5 + $0x1c8] sm:$0xff]
    %v1991 = vld [vmem:[#allocation5 + $0x1d0] sm:$0xff]
    %v1992 = vld [vmem:[#allocation5 + $0x1d8] sm:$0xff]
    %v1993 = vld [vmem:[#allocation5 + $0x1e0] sm:$0xff]
    %v1994 = vld [vmem:[#allocation5 + $0x1e8] sm:$0xff]
    %v1995 = vld [vmem:[#allocation5 + $0x1f0] sm:$0xff]
    %v1996 = vld [vmem:[#allocation5 + $0x1f8] sm:$0xff]
    %v1997 = vld [vmem:[#allocation5 + $0x200] sm:$0xff]
    %v1998 = vld [vmem:[#allocation5 + $0x208] sm:$0xff]
    %v1999 = vld [vmem:[#allocation5 + $0x210] sm:$0xff]
    %v2000 = vld [vmem:[#allocation5 + $0x218] sm:$0xff]
    %v2001 = vld [vmem:[#allocation5 + $0x220] sm:$0xff]
    %v2002 = vld [vmem:[#allocation5 + $0x228] sm:$0xff]
    %v2003 = vld [vmem:[#allocation5 + $0x230] sm:$0xff]
    %v2004 = vld [vmem:[#allocation5 + $0x238] sm:$0xff]
    %v2005 = vld [vmem:[#allocation5 + $0x240] sm:$0xff]
    %v2006 = vld [vmem:[#allocation5 + $0x248] sm:$0xff]
    %v2007 = vld [vmem:[#allocation5 + $0x250] sm:$0xff]
    %v2008 = vld [vmem:[#allocation5 + $0x258] sm:$0xff]
    %v2009 = vld [vmem:[#allocation5 + $0x260] sm:$0xff]
    %v2010 = vld [vmem:[#allocation5 + $0x268] sm:$0xff]
    %v2011 = vld [vmem:[#allocation5 + $0x270] sm:$0xff]
    %v2012 = vld [vmem:[#allocation5 + $0x278] sm:$0xff]
    %v2013 = vld [vmem:[#allocation5 + $0x280] sm:$0xff]
    %v2014 = vld [vmem:[#allocation5 + $0x288] sm:$0xff]
    %v2015 = vld [vmem:[#allocation5 + $0x290] sm:$0xff]
    %v2016 = vld [vmem:[#allocation5 + $0x298] sm:$0xff]
    %v2017 = vld [vmem:[#allocation5 + $0x2a0] sm:$0xff]
    %v2018 = vld [vmem:[#allocation5 + $0x2a8] sm:$0xff]
    %v2019 = vld [vmem:[#allocation5 + $0x2b0] sm:$0xff]
    %v2020 = vld [vmem:[#allocation5 + $0x2b8] sm:$0xff]
    %v2021 = vld [vmem:[#allocation5 + $0x2c0] sm:$0xff]
    %v2022 = vld [vmem:[#allocation5 + $0x2c8] sm:$0xff]
    %v2023 = vld [vmem:[#allocation5 + $0x2d0] sm:$0xff]
    %v2024 = vld [vmem:[#allocation5 + $0x2d8] sm:$0xff]
    %v2025 = vld [vmem:[#allocation5 + $0x2e0] sm:$0xff]
    %v2026 = vld [vmem:[#allocation5 + $0x2e8] sm:$0xff]
    %v2027 = vld [vmem:[#allocation5 + $0x2f0] sm:$0xff]
    %v2028 = vld [vmem:[#allocation5 + $0x2f8] sm:$0xff]
    %vm2029 = vsmask.f32 4352
    %v2031 = vshrl.u32 %v1915, 16
    %v2033 = vrot.slane %v2031, 3
    %v2034 = vshll.u32 %v1915, 16
    %v2036 = vrot.slane %v2034, 4
    %v2037 = vor.u32 %v2033, %v2036
    %v2039 = vshrl.u32 %v1921, 16
    %v2041 = vrot.slane %v2039, 3
    %v2042 = vshll.u32 %v1921, 16
    %v2044 = vrot.slane %v2042, 4
    %v2045 = vor.u32 %v2041, %v2044
    %v2046 = vsel %vm2029, %v2037, %v2045
    %v2048 = vshrl.u32 %v1916, 16
    %v2050 = vrot.slane %v2048, 3
    %v2051 = vshll.u32 %v1916, 16
    %v2053 = vrot.slane %v2051, 4
    %v2054 = vor.u32 %v2050, %v2053
    %v2056 = vshrl.u32 %v1922, 16
    %v2058 = vrot.slane %v2056, 3
    %v2059 = vshll.u32 %v1922, 16
    %v2061 = vrot.slane %v2059, 4
    %v2062 = vor.u32 %v2058, %v2061
    %v2063 = vsel %vm2029, %v2054, %v2062
    %v2065 = vshrl.u32 %v1917, 16
    %v2067 = vrot.slane %v2065, 3
    %v2068 = vshll.u32 %v1917, 16
    %v2070 = vrot.slane %v2068, 4
    %v2071 = vor.u32 %v2067, %v2070
    %v2073 = vshrl.u32 %v1923, 16
    %v2075 = vrot.slane %v2073, 3
    %v2076 = vshll.u32 %v1923, 16
    %v2078 = vrot.slane %v2076, 4
    %v2079 = vor.u32 %v2075, %v2078
    %v2080 = vsel %vm2029, %v2071, %v2079
    %v2082 = vshrl.u32 %v1918, 16
    %v2084 = vrot.slane %v2082, 3
    %v2085 = vshll.u32 %v1918, 16
    %v2087 = vrot.slane %v2085, 4
    %v2088 = vor.u32 %v2084, %v2087
    %v2090 = vshrl.u32 %v1924, 16
    %v2092 = vrot.slane %v2090, 3
    %v2093 = vshll.u32 %v1924, 16
    %v2095 = vrot.slane %v2093, 4
    %v2096 = vor.u32 %v2092, %v2095
    %v2097 = vsel %vm2029, %v2088, %v2096
    %v2099 = vshrl.u32 %v1919, 16
    %v2101 = vrot.slane %v2099, 3
    %v2102 = vshll.u32 %v1919, 16
    %v2104 = vrot.slane %v2102, 4
    %v2105 = vor.u32 %v2101, %v2104
    %v2107 = vshrl.u32 %v1925, 16
    %v2109 = vrot.slane %v2107, 3
    %v2110 = vshll.u32 %v1925, 16
    %v2112 = vrot.slane %v2110, 4
    %v2113 = vor.u32 %v2109, %v2112
    %v2114 = vsel %vm2029, %v2105, %v2113
    %v2116 = vshrl.u32 %v1920, 16
    %v2118 = vrot.slane %v2116, 3
    %v2119 = vshll.u32 %v1920, 16
    %v2121 = vrot.slane %v2119, 4
    %v2122 = vor.u32 %v2118, %v2121
    %v2124 = vshrl.u32 %v1926, 16
    %v2126 = vrot.slane %v2124, 3
    %v2127 = vshll.u32 %v1926, 16
    %v2129 = vrot.slane %v2127, 4
    %v2130 = vor.u32 %v2126, %v2129
    %v2131 = vsel %vm2029, %v2122, %v2130
    %v2133 = vshrl.u32 %v1927, 16
    %v2135 = vrot.slane %v2133, 3
    %v2136 = vshll.u32 %v1927, 16
    %v2138 = vrot.slane %v2136, 4
    %v2139 = vor.u32 %v2135, %v2138
    %v2140 = vsel %vm2029, %v2045, %v2139
    %v2142 = vshrl.u32 %v1928, 16
    %v2144 = vrot.slane %v2142, 3
    %v2145 = vshll.u32 %v1928, 16
    %v2147 = vrot.slane %v2145, 4
    %v2148 = vor.u32 %v2144, %v2147
    %v2149 = vsel %vm2029, %v2062, %v2148
    %v2151 = vshrl.u32 %v1929, 16
    %v2153 = vrot.slane %v2151, 3
    %v2154 = vshll.u32 %v1929, 16
    %v2156 = vrot.slane %v2154, 4
    %v2157 = vor.u32 %v2153, %v2156
    %v2158 = vsel %vm2029, %v2079, %v2157
    %v2160 = vshrl.u32 %v1930, 16
    %v2162 = vrot.slane %v2160, 3
    %v2163 = vshll.u32 %v1930, 16
    %v2165 = vrot.slane %v2163, 4
    %v2166 = vor.u32 %v2162, %v2165
    %v2167 = vsel %vm2029, %v2096, %v2166
    %v2169 = vshrl.u32 %v1931, 16
    %v2171 = vrot.slane %v2169, 3
    %v2172 = vshll.u32 %v1931, 16
    %v2174 = vrot.slane %v2172, 4
    %v2175 = vor.u32 %v2171, %v2174
    %v2176 = vsel %vm2029, %v2113, %v2175
    %v2178 = vshrl.u32 %v1932, 16
    %v2180 = vrot.slane %v2178, 3
    %v2181 = vshll.u32 %v1932, 16
    %v2183 = vrot.slane %v2181, 4
    %v2184 = vor.u32 %v2180, %v2183
    %v2185 = vsel %vm2029, %v2130, %v2184
    %v2294 = vunpack.c.l.b16 %v1933
    %v2295 = vunpack.c.h.b16 %v1933
    %v2296 = vunpack.c.l.b16 %v1934
    %v2297 = vunpack.c.h.b16 %v1934
    %v2298 = vunpack.c.l.b16 %v1935
    %v2299 = vunpack.c.h.b16 %v1935
    %v2300 = vunpack.c.l.b16 %v1936
    %v2301 = vunpack.c.h.b16 %v1936
    %v2302 = vunpack.c.l.b16 %v1937
    %v2303 = vunpack.c.h.b16 %v1937
    %v2304 = vunpack.c.l.b16 %v1938
    %v2305 = vunpack.c.h.b16 %v1938
    %v2306 = vunpack.c.l.b16 %v1939
    %v2307 = vunpack.c.h.b16 %v1939
    %v2308 = vunpack.c.l.b16 %v1940
    %v2309 = vunpack.c.h.b16 %v1940
    %v2310 = vunpack.c.l.b16 %v1941
    %v2311 = vunpack.c.h.b16 %v1941
    %v2312 = vunpack.c.l.b16 %v1942
    %v2313 = vunpack.c.h.b16 %v1942
    %v2314 = vunpack.c.l.b16 %v1943
    %v2315 = vunpack.c.h.b16 %v1943
    %v2316 = vunpack.c.l.b16 %v1944
    %v2317 = vunpack.c.h.b16 %v1944
    %v2318 = vunpack.c.l.b16 %v1945
    %v2319 = vunpack.c.h.b16 %v1945
    %v2320 = vunpack.c.l.b16 %v1946
    %v2321 = vunpack.c.h.b16 %v1946
    %v2322 = vunpack.c.l.b16 %v1947
    %v2323 = vunpack.c.h.b16 %v1947
    %v2324 = vunpack.c.l.b16 %v1948
    %v2325 = vunpack.c.h.b16 %v1948
    %v2326 = vunpack.c.l.b16 %v1949
    %v2327 = vunpack.c.h.b16 %v1949
    %v2328 = vunpack.c.l.b16 %v1950
    %v2329 = vunpack.c.h.b16 %v1950
    %v2330 = vunpack.c.l.b16 %v1951
    %v2331 = vunpack.c.h.b16 %v1951
    %v2332 = vunpack.c.l.b16 %v1952
    %v2333 = vunpack.c.h.b16 %v1952
    %v2334 = vunpack.c.l.b16 %v1953
    %v2335 = vunpack.c.h.b16 %v1953
    %v2336 = vunpack.c.l.b16 %v1954
    %v2337 = vunpack.c.h.b16 %v1954
    %v2338 = vunpack.c.l.b16 %v1955
    %v2339 = vunpack.c.h.b16 %v1955
    %v2340 = vunpack.c.l.b16 %v1956
    %v2341 = vunpack.c.h.b16 %v1956
    %v2342 = vunpack.c.l.b16 %v1957
    %v2343 = vunpack.c.h.b16 %v1957
    %v2344 = vunpack.c.l.b16 %v1958
    %v2345 = vunpack.c.h.b16 %v1958
    %v2346 = vunpack.c.l.b16 %v1959
    %v2347 = vunpack.c.h.b16 %v1959
    %v2348 = vunpack.c.l.b16 %v1960
    %v2349 = vunpack.c.h.b16 %v1960
    %v2350 = vunpack.c.l.b16 %v1961
    %v2351 = vunpack.c.h.b16 %v1961
    %v2352 = vunpack.c.l.b16 %v1962
    %v2353 = vunpack.c.h.b16 %v1962
    %v2354 = vunpack.c.l.b16 %v1963
    %v2355 = vunpack.c.h.b16 %v1963
    %v2356 = vunpack.c.l.b16 %v1964
    %v2357 = vunpack.c.h.b16 %v1964
    %v2358 = vunpack.c.l.b16 %v1965
    %v2359 = vunpack.c.h.b16 %v1965
    %v2360 = vunpack.c.l.b16 %v1966
    %v2361 = vunpack.c.h.b16 %v1966
    %v2362 = vunpack.c.l.b16 %v1967
    %v2363 = vunpack.c.h.b16 %v1967
    %v2364 = vunpack.c.l.b16 %v1968
    %v2365 = vunpack.c.h.b16 %v1968
    %v2366 = vunpack.c.l.b16 %v1969
    %v2367 = vunpack.c.h.b16 %v1969
    %v2368 = vunpack.c.l.b16 %v1970
    %v2369 = vunpack.c.h.b16 %v1970
    %v2370 = vunpack.c.l.b16 %v1971
    %v2371 = vunpack.c.h.b16 %v1971
    %v2372 = vunpack.c.l.b16 %v1972
    %v2373 = vunpack.c.h.b16 %v1972
    %v2374 = vunpack.c.l.b16 %v1973
    %v2375 = vunpack.c.h.b16 %v1973
    %v2376 = vunpack.c.l.b16 %v1974
    %v2377 = vunpack.c.h.b16 %v1974
    %v2378 = vunpack.c.l.b16 %v1975
    %v2379 = vunpack.c.h.b16 %v1975
    %v2380 = vunpack.c.l.b16 %v1976
    %v2381 = vunpack.c.h.b16 %v1976
    %v2382 = vunpack.c.l.b16 %v1977
    %v2383 = vunpack.c.h.b16 %v1977
    %v2384 = vunpack.c.l.b16 %v1978
    %v2385 = vunpack.c.h.b16 %v1978
    %v2386 = vunpack.c.l.b16 %v1979
    %v2387 = vunpack.c.h.b16 %v1979
    %v2388 = vunpack.c.l.b16 %v1980
    %v2389 = vunpack.c.h.b16 %v1980
    %v2390 = vunpack.c.l.b16 %v1981
    %v2391 = vunpack.c.h.b16 %v1981
    %v2392 = vunpack.c.l.b16 %v1982
    %v2393 = vunpack.c.h.b16 %v1982
    %v2394 = vunpack.c.l.b16 %v1983
    %v2395 = vunpack.c.h.b16 %v1983
    %v2396 = vunpack.c.l.b16 %v1984
    %v2397 = vunpack.c.h.b16 %v1984
    %v2398 = vunpack.c.l.b16 %v1985
    %v2399 = vunpack.c.h.b16 %v1985
    %v2400 = vunpack.c.l.b16 %v1986
    %v2401 = vunpack.c.h.b16 %v1986
    %v2402 = vunpack.c.l.b16 %v1987
    %v2403 = vunpack.c.h.b16 %v1987
    %v2404 = vunpack.c.l.b16 %v1988
    %v2405 = vunpack.c.h.b16 %v1988
    %v2406 = vunpack.c.l.b16 %v1989
    %v2407 = vunpack.c.h.b16 %v1989
    %v2408 = vunpack.c.l.b16 %v1990
    %v2409 = vunpack.c.h.b16 %v1990
    %v2410 = vunpack.c.l.b16 %v1991
    %v2411 = vunpack.c.h.b16 %v1991
    %v2412 = vunpack.c.l.b16 %v1992
    %v2413 = vunpack.c.h.b16 %v1992
    %v2414 = vunpack.c.l.b16 %v1993
    %v2415 = vunpack.c.h.b16 %v1993
    %v2416 = vunpack.c.l.b16 %v1994
    %v2417 = vunpack.c.h.b16 %v1994
    %v2418 = vunpack.c.l.b16 %v1995
    %v2419 = vunpack.c.h.b16 %v1995
    %v2420 = vunpack.c.l.b16 %v1996
    %v2421 = vunpack.c.h.b16 %v1996
    %v2422 = vunpack.c.l.b16 %v1997
    %v2423 = vunpack.c.h.b16 %v1997
    %v2424 = vunpack.c.l.b16 %v1998
    %v2425 = vunpack.c.h.b16 %v1998
    %v2426 = vunpack.c.l.b16 %v1999
    %v2427 = vunpack.c.h.b16 %v1999
    %v2428 = vunpack.c.l.b16 %v2000
    %v2429 = vunpack.c.h.b16 %v2000
    %v2430 = vunpack.c.l.b16 %v2001
    %v2431 = vunpack.c.h.b16 %v2001
    %v2432 = vunpack.c.l.b16 %v2002
    %v2433 = vunpack.c.h.b16 %v2002
    %v2434 = vunpack.c.l.b16 %v2003
    %v2435 = vunpack.c.h.b16 %v2003
    %v2436 = vunpack.c.l.b16 %v2004
    %v2437 = vunpack.c.h.b16 %v2004
    %v2438 = vunpack.c.l.b16 %v2005
    %v2439 = vunpack.c.h.b16 %v2005
    %v2440 = vunpack.c.l.b16 %v2006
    %v2441 = vunpack.c.h.b16 %v2006
    %v2442 = vunpack.c.l.b16 %v2007
    %v2443 = vunpack.c.h.b16 %v2007
    %v2444 = vunpack.c.l.b16 %v2008
    %v2445 = vunpack.c.h.b16 %v2008
    %v2446 = vunpack.c.l.b16 %v2009
    %v2447 = vunpack.c.h.b16 %v2009
    %v2448 = vunpack.c.l.b16 %v2010
    %v2449 = vunpack.c.h.b16 %v2010
    %v2450 = vunpack.c.l.b16 %v2011
    %v2451 = vunpack.c.h.b16 %v2011
    %v2452 = vunpack.c.l.b16 %v2012
    %v2453 = vunpack.c.h.b16 %v2012
    %v2454 = vunpack.c.l.b16 %v2013
    %v2455 = vunpack.c.h.b16 %v2013
    %v2456 = vunpack.c.l.b16 %v2014
    %v2457 = vunpack.c.h.b16 %v2014
    %v2458 = vunpack.c.l.b16 %v2015
    %v2459 = vunpack.c.h.b16 %v2015
    %v2460 = vunpack.c.l.b16 %v2016
    %v2461 = vunpack.c.h.b16 %v2016
    %v2462 = vunpack.c.l.b16 %v2017
    %v2463 = vunpack.c.h.b16 %v2017
    %v2464 = vunpack.c.l.b16 %v2018
    %v2465 = vunpack.c.h.b16 %v2018
    %v2466 = vunpack.c.l.b16 %v2019
    %v2467 = vunpack.c.h.b16 %v2019
    %v2468 = vunpack.c.l.b16 %v2020
    %v2469 = vunpack.c.h.b16 %v2020
    %v2470 = vunpack.c.l.b16 %v2021
    %v2471 = vunpack.c.h.b16 %v2021
    %v2472 = vunpack.c.l.b16 %v2022
    %v2473 = vunpack.c.h.b16 %v2022
    %v2474 = vunpack.c.l.b16 %v2023
    %v2475 = vunpack.c.h.b16 %v2023
    %v2476 = vunpack.c.l.b16 %v2024
    %v2477 = vunpack.c.h.b16 %v2024
    %v2478 = vunpack.c.l.b16 %v2025
    %v2479 = vunpack.c.h.b16 %v2025
    %v2480 = vunpack.c.l.b16 %v2026
    %v2481 = vunpack.c.h.b16 %v2026
    %v2482 = vunpack.c.l.b16 %v2027
    %v2483 = vunpack.c.h.b16 %v2027
    %v2484 = vunpack.c.l.b16 %v2028
    %v2485 = vunpack.c.h.b16 %v2028
    %v2486 = vpack.c.b16 %v2296, %v2294
    %v2487 = vpack.c.b16 %v2297, %v2295
    %v2488 = vpack.c.b16 %v2300, %v2298
    %v2489 = vpack.c.b16 %v2301, %v2299
    %v2490 = vpack.c.b16 %v2304, %v2302
    %v2491 = vpack.c.b16 %v2305, %v2303
    %v2492 = vpack.c.b16 %v2308, %v2306
    %v2493 = vpack.c.b16 %v2309, %v2307
    %v2494 = vpack.c.b16 %v2312, %v2310
    %v2495 = vpack.c.b16 %v2313, %v2311
    %v2496 = vpack.c.b16 %v2316, %v2314
    %v2497 = vpack.c.b16 %v2317, %v2315
    %v2498 = vpack.c.b16 %v2320, %v2318
    %v2499 = vpack.c.b16 %v2321, %v2319
    %v2500 = vpack.c.b16 %v2324, %v2322
    %v2501 = vpack.c.b16 %v2325, %v2323
    %v2502 = vpack.c.b16 %v2328, %v2326
    %v2503 = vpack.c.b16 %v2329, %v2327
    %v2504 = vpack.c.b16 %v2332, %v2330
    %v2505 = vpack.c.b16 %v2333, %v2331
    %v2506 = vpack.c.b16 %v2336, %v2334
    %v2507 = vpack.c.b16 %v2337, %v2335
    %v2508 = vpack.c.b16 %v2340, %v2338
    %v2509 = vpack.c.b16 %v2341, %v2339
    %v2510 = vpack.c.b16 %v2344, %v2342
    %v2511 = vpack.c.b16 %v2345, %v2343
    %v2512 = vpack.c.b16 %v2348, %v2346
    %v2513 = vpack.c.b16 %v2349, %v2347
    %v2514 = vpack.c.b16 %v2352, %v2350
    %v2515 = vpack.c.b16 %v2353, %v2351
    %v2516 = vpack.c.b16 %v2356, %v2354
    %v2517 = vpack.c.b16 %v2357, %v2355
    %v2518 = vpack.c.b16 %v2360, %v2358
    %v2519 = vpack.c.b16 %v2361, %v2359
    %v2520 = vpack.c.b16 %v2364, %v2362
    %v2521 = vpack.c.b16 %v2365, %v2363
    %v2522 = vpack.c.b16 %v2368, %v2366
    %v2523 = vpack.c.b16 %v2369, %v2367
    %v2524 = vpack.c.b16 %v2372, %v2370
    %v2525 = vpack.c.b16 %v2373, %v2371
    %v2526 = vpack.c.b16 %v2376, %v2374
    %v2527 = vpack.c.b16 %v2377, %v2375
    %v2528 = vpack.c.b16 %v2380, %v2378
    %v2529 = vpack.c.b16 %v2381, %v2379
    %v2530 = vpack.c.b16 %v2384, %v2382
    %v2531 = vpack.c.b16 %v2385, %v2383
    %v2532 = vpack.c.b16 %v2388, %v2386
    %v2533 = vpack.c.b16 %v2389, %v2387
    %v2534 = vpack.c.b16 %v2392, %v2390
    %v2535 = vpack.c.b16 %v2393, %v2391
    %v2536 = vpack.c.b16 %v2396, %v2394
    %v2537 = vpack.c.b16 %v2397, %v2395
    %v2538 = vpack.c.b16 %v2400, %v2398
    %v2539 = vpack.c.b16 %v2401, %v2399
    %v2540 = vpack.c.b16 %v2404, %v2402
    %v2541 = vpack.c.b16 %v2405, %v2403
    %v2542 = vpack.c.b16 %v2408, %v2406
    %v2543 = vpack.c.b16 %v2409, %v2407
    %v2544 = vpack.c.b16 %v2412, %v2410
    %v2545 = vpack.c.b16 %v2413, %v2411
    %v2546 = vpack.c.b16 %v2416, %v2414
    %v2547 = vpack.c.b16 %v2417, %v2415
    %v2548 = vpack.c.b16 %v2420, %v2418
    %v2549 = vpack.c.b16 %v2421, %v2419
    %v2550 = vpack.c.b16 %v2424, %v2422
    %v2551 = vpack.c.b16 %v2425, %v2423
    %v2552 = vpack.c.b16 %v2428, %v2426
    %v2553 = vpack.c.b16 %v2429, %v2427
    %v2554 = vpack.c.b16 %v2432, %v2430
    %v2555 = vpack.c.b16 %v2433, %v2431
    %v2556 = vpack.c.b16 %v2436, %v2434
    %v2557 = vpack.c.b16 %v2437, %v2435
    %v2558 = vpack.c.b16 %v2440, %v2438
    %v2559 = vpack.c.b16 %v2441, %v2439
    %v2560 = vpack.c.b16 %v2444, %v2442
    %v2561 = vpack.c.b16 %v2445, %v2443
    %v2562 = vpack.c.b16 %v2448, %v2446
    %v2563 = vpack.c.b16 %v2449, %v2447
    %v2564 = vpack.c.b16 %v2452, %v2450
    %v2565 = vpack.c.b16 %v2453, %v2451
    %v2566 = vpack.c.b16 %v2456, %v2454
    %v2567 = vpack.c.b16 %v2457, %v2455
    %v2568 = vpack.c.b16 %v2460, %v2458
    %v2569 = vpack.c.b16 %v2461, %v2459
    %v2570 = vpack.c.b16 %v2464, %v2462
    %v2571 = vpack.c.b16 %v2465, %v2463
    %v2572 = vpack.c.b16 %v2468, %v2466
    %v2573 = vpack.c.b16 %v2469, %v2467
    %v2574 = vpack.c.b16 %v2472, %v2470
    %v2575 = vpack.c.b16 %v2473, %v2471
    %v2576 = vpack.c.b16 %v2476, %v2474
    %v2577 = vpack.c.b16 %v2477, %v2475
    %v2578 = vpack.c.b16 %v2480, %v2478
    %v2579 = vpack.c.b16 %v2481, %v2479
    %v2580 = vpack.c.b16 %v2484, %v2482
    %v2581 = vpack.c.b16 %v2485, %v2483
    %2678 = vmatprep.subr.bf16.mxu0 %v2487
    %2679 = vmatpush1.bf16.msra.mxu0 %v2486
    %2680 = vmatprep.subr.bf16.mxu0 %v2489
    %2681 = vmatpush1.bf16.msra.mxu0 %v2488
    %2682 = vmatprep.subr.bf16.mxu0 %v2491
    %2683 = vmatpush1.bf16.msra.mxu0 %v2490
    %2684 = vmatprep.subr.bf16.mxu0 %v2493
    %2685 = vmatpush1.bf16.msra.mxu0 %v2492
    %2686 = vmatprep.subr.bf16.mxu0 %v2495
    %2687 = vmatpush1.bf16.msra.mxu0 %v2494
    %2688 = vmatprep.subr.bf16.mxu0 %v2497
    %2689 = vmatpush1.bf16.msra.mxu0 %v2496
    %2690 = vmatprep.subr.bf16.mxu0 %v2499
    %2691 = vmatpush1.bf16.msra.mxu0 %v2498
    %2692 = vmatprep.subr.bf16.mxu0 %v2501
    %2693 = vmatpush1.bf16.msra.mxu0 %v2500
    %2694 = vmatprep.subr.bf16.mxu0 %v2503
    %2695 = vmatpush1.bf16.msra.mxu0 %v2502
    %2696 = vmatprep.subr.bf16.mxu0 %v2505
    %2697 = vmatpush1.bf16.msra.mxu0 %v2504
    %2698 = vmatprep.subr.bf16.mxu0 %v2507
    %2699 = vmatpush1.bf16.msra.mxu0 %v2506
    %2700 = vmatprep.subr.bf16.mxu0 %v2509
    %2701 = vmatpush1.bf16.msra.mxu0 %v2508
    %2702 = vmatprep.subr.bf16.mxu0 %v2511
    %2703 = vmatpush1.bf16.msra.mxu0 %v2510
    %2704 = vmatprep.subr.bf16.mxu0 %v2513
    %2705 = vmatpush1.bf16.msra.mxu0 %v2512
    %2706 = vmatprep.subr.bf16.mxu0 %v2515
    %2707 = vmatpush1.bf16.msra.mxu0 %v2514
    %2708 = vmatprep.subr.bf16.mxu0 %v2517
    %2709 = vmatpush1.bf16.msra.mxu0 %v2516
    %2710 = vmatprep.mubr.bf16.mxu0 %v2063
    %2711 = vmatmul.mubr.bf16.gmra.mrb[0].mxu0 %v2046
    %v2712 = vpop.f32.mrb[0].mxu0
    %v2713 = vadd.f32 0.0, %v2712
    %v2714 = vpop.f32.mrb[0].mxu0
    %v2715 = vadd.f32 0.0, %v2714
    %v2716 = vpop.f32.mrb[0].mxu0
    %v2717 = vadd.f32 0.0, %v2716
    %v2718 = vpop.f32.mrb[0].mxu0
    %v2719 = vadd.f32 0.0, %v2718
    %2720 = vmatprep.mubr.bf16.mxu0 %v2149
    %2721 = vmatmul.mubr.bf16.gmra.mrb[0].mxu0 %v2140
    %v2722 = vpop.f32.mrb[0].mxu0
    %v2723 = vadd.f32 0.0, %v2722
    %v2724 = vpop.f32.mrb[0].mxu0
    %v2725 = vadd.f32 0.0, %v2724
    %v2726 = vpop.f32.mrb[0].mxu0
    %v2727 = vadd.f32 0.0, %v2726
    %v2728 = vpop.f32.mrb[0].mxu0
    %v2729 = vadd.f32 0.0, %v2728
    %2730 = vdwg.mxu0
    %2731 = vmatprep.subr.bf16.mxu0 %v2519
    %2732 = vmatpush1.bf16.msra.mxu0 %v2518
    %2733 = vmatprep.subr.bf16.mxu0 %v2521
    %2734 = vmatpush1.bf16.msra.mxu0 %v2520
    %2735 = vmatprep.subr.bf16.mxu0 %v2523
    %2736 = vmatpush1.bf16.msra.mxu0 %v2522
    %2737 = vmatprep.subr.bf16.mxu0 %v2525
    %2738 = vmatpush1.bf16.msra.mxu0 %v2524
    %2739 = vmatprep.subr.bf16.mxu0 %v2527
    %2740 = vmatpush1.bf16.msra.mxu0 %v2526
    %2741 = vmatprep.subr.bf16.mxu0 %v2529
    %2742 = vmatpush1.bf16.msra.mxu0 %v2528
    %2743 = vmatprep.subr.bf16.mxu0 %v2531
    %2744 = vmatpush1.bf16.msra.mxu0 %v2530
    %2745 = vmatprep.subr.bf16.mxu0 %v2533
    %2746 = vmatpush1.bf16.msra.mxu0 %v2532
    %2747 = vmatprep.subr.bf16.mxu0 %v2535
    %2748 = vmatpush1.bf16.msra.mxu0 %v2534
    %2749 = vmatprep.subr.bf16.mxu0 %v2537
    %2750 = vmatpush1.bf16.msra.mxu0 %v2536
    %2751 = vmatprep.subr.bf16.mxu0 %v2539
    %2752 = vmatpush1.bf16.msra.mxu0 %v2538
    %2753 = vmatprep.subr.bf16.mxu0 %v2541
    %2754 = vmatpush1.bf16.msra.mxu0 %v2540
    %2755 = vmatprep.subr.bf16.mxu0 %v2543
    %2756 = vmatpush1.bf16.msra.mxu0 %v2542
    %2757 = vmatprep.subr.bf16.mxu0 %v2545
    %2758 = vmatpush1.bf16.msra.mxu0 %v2544
    %2759 = vmatprep.subr.bf16.mxu0 %v2547
    %2760 = vmatpush1.bf16.msra.mxu0 %v2546
    %2761 = vmatprep.subr.bf16.mxu0 %v2549
    %2762 = vmatpush1.bf16.msra.mxu0 %v2548
    %2763 = vmatprep.mubr.bf16.mxu0 %v2097
    %2764 = vmatmul.mubr.bf16.gmra.mrb[0].mxu0 %v2080
    %v2765 = vpop.f32.mrb[0].mxu0
    %v2766 = vadd.f32 %v2713, %v2765
    %v2767 = vpop.f32.mrb[0].mxu0
    %v2768 = vadd.f32 %v2715, %v2767
    %v2769 = vpop.f32.mrb[0].mxu0
    %v2770 = vadd.f32 %v2717, %v2769
    %v2771 = vpop.f32.mrb[0].mxu0
    %v2772 = vadd.f32 %v2719, %v2771
    %2773 = vmatprep.mubr.bf16.mxu0 %v2167
    %2774 = vmatmul.mubr.bf16.gmra.mrb[0].mxu0 %v2158
    %v2775 = vpop.f32.mrb[0].mxu0
    %v2776 = vadd.f32 %v2723, %v2775
    %v2777 = vpop.f32.mrb[0].mxu0
    %v2778 = vadd.f32 %v2725, %v2777
    %v2779 = vpop.f32.mrb[0].mxu0
    %v2780 = vadd.f32 %v2727, %v2779
    %v2781 = vpop.f32.mrb[0].mxu0
    %v2782 = vadd.f32 %v2729, %v2781
    %2783 = vdwg.mxu0
    %2784 = vmatprep.subr.bf16.mxu0 %v2551
    %2785 = vmatpush1.bf16.msra.mxu0 %v2550
    %2786 = vmatprep.subr.bf16.mxu0 %v2553
    %2787 = vmatpush1.bf16.msra.mxu0 %v2552
    %2788 = vmatprep.subr.bf16.mxu0 %v2555
    %2789 = vmatpush1.bf16.msra.mxu0 %v2554
    %2790 = vmatprep.subr.bf16.mxu0 %v2557
    %2791 = vmatpush1.bf16.msra.mxu0 %v2556
    %2792 = vmatprep.subr.bf16.mxu0 %v2559
    %2793 = vmatpush1.bf16.msra.mxu0 %v2558
    %2794 = vmatprep.subr.bf16.mxu0 %v2561
    %2795 = vmatpush1.bf16.msra.mxu0 %v2560
    %2796 = vmatprep.subr.bf16.mxu0 %v2563
    %2797 = vmatpush1.bf16.msra.mxu0 %v2562
    %2798 = vmatprep.subr.bf16.mxu0 %v2565
    %2799 = vmatpush1.bf16.msra.mxu0 %v2564
    %2800 = vmatprep.subr.bf16.mxu0 %v2567
    %2801 = vmatpush1.bf16.msra.mxu0 %v2566
    %2802 = vmatprep.subr.bf16.mxu0 %v2569
    %2803 = vmatpush1.bf16.msra.mxu0 %v2568
    %2804 = vmatprep.subr.bf16.mxu0 %v2571
    %2805 = vmatpush1.bf16.msra.mxu0 %v2570
    %2806 = vmatprep.subr.bf16.mxu0 %v2573
    %2807 = vmatpush1.bf16.msra.mxu0 %v2572
    %2808 = vmatprep.subr.bf16.mxu0 %v2575
    %2809 = vmatpush1.bf16.msra.mxu0 %v2574
    %2810 = vmatprep.subr.bf16.mxu0 %v2577
    %2811 = vmatpush1.bf16.msra.mxu0 %v2576
    %2812 = vmatprep.subr.bf16.mxu0 %v2579
    %2813 = vmatpush1.bf16.msra.mxu0 %v2578
    %2814 = vmatprep.subr.bf16.mxu0 %v2581
    %2815 = vmatpush1.bf16.msra.mxu0 %v2580
    %2816 = vmatprep.mubr.bf16.mxu0 %v2131
    %2817 = vmatmul.mubr.bf16.gmra.mrb[0].mxu0 %v2114
    %v2818 = vpop.f32.mrb[0].mxu0
    %v2819 = vadd.f32 %v2766, %v2818
    %v2820 = vpop.f32.mrb[0].mxu0
    %v2821 = vadd.f32 %v2768, %v2820
    %v2822 = vpop.f32.mrb[0].mxu0
    %v2823 = vadd.f32 %v2770, %v2822
    %v2824 = vpop.f32.mrb[0].mxu0
    %v2825 = vadd.f32 %v2772, %v2824
    %2826 = vmatprep.mubr.bf16.mxu0 %v2185
    %2827 = vmatmul.mubr.bf16.gmra.mrb[0].mxu0 %v2176
    %v2828 = vpop.f32.mrb[0].mxu0
    %v2829 = vadd.f32 %v2776, %v2828
    %v2830 = vpop.f32.mrb[0].mxu0
    %v2831 = vadd.f32 %v2778, %v2830
    %v2832 = vpop.f32.mrb[0].mxu0
    %v2833 = vadd.f32 %v2780, %v2832
    %v2834 = vpop.f32.mrb[0].mxu0
    %v2835 = vadd.f32 %v2782, %v2834
    %2836 = vdwg.mxu0
    %s2837 = scalar_lea.vmem %s3, 2
    %v2838 = vld [vmem:[%s2837] ss:$4 sm:$0x3]
    %s2839 = scalar_lea.vmem %s3, 3
    %v2840 = vld [vmem:[%s2839] ss:$4 sm:$0x3]
    %v2841 = vmul.f32 %v2819, %v106
    %v2842 = vmul.f32 %v2821, %v106
    %v2843 = vmul.f32 %v2823, %v107
    %v2844 = vmul.f32 %v2825, %v107
    %v2845 = vmul.f32 %v2829, %v108
    %v2846 = vmul.f32 %v2831, %v108
    %v2847 = vmul.f32 %v2833, %v109
    %v2848 = vmul.f32 %v2835, %v109
    %v2849 = vadd.f32 %v2841, %v2843
    %v2850 = vadd.f32 %v2849, %v2845
    %v2851 = vadd.f32 %v2850, %v2847
    %v2852 = vrot.slane %v2851, 4
    %v2853 = vadd.f32 %v2851, %v2852
    %v2854 = vrot.slane %v2853, 2
    %v2855 = vadd.f32 %v2853, %v2854
    %v2856 = vrot.slane %v2855, 1
    %v2857 = vadd.f32 %v2855, %v2856
    %v2858 = vadd.f32 %v2842, %v2844
    %v2859 = vadd.f32 %v2858, %v2846
    %v2860 = vadd.f32 %v2859, %v2848
    %v2861 = vrot.slane %v2860, 4
    %v2862 = vadd.f32 %v2860, %v2861
    %v2863 = vrot.slane %v2862, 2
    %v2864 = vadd.f32 %v2862, %v2863
    %v2865 = vrot.slane %v2864, 1
    %v2866 = vadd.f32 %v2864, %v2865
    %2867 = vmatprep.subr.mxu0 %v614
    %2868 = vmatpush1.msra.mxu0 %v613
    %2869 = vmatprep.subr.mxu0 %v616
    %2870 = vmatpush1.msra.mxu0 %v615
    %2871 = vmatprep.subr.mxu0 %v618
    %2872 = vmatpush1.msra.mxu0 %v617
    %2873 = vmatprep.subr.mxu0 %v620
    %2874 = vmatpush1.msra.mxu0 %v619
    %2875 = vmatprep.subr.mxu0 %v622
    %2876 = vmatpush1.msra.mxu0 %v621
    %2877 = vmatprep.subr.mxu0 %v624
    %2878 = vmatpush1.msra.mxu0 %v623
    %2879 = vmatprep.subr.mxu0 %v626
    %2880 = vmatpush1.msra.mxu0 %v625
    %2881 = vmatprep.subr.mxu0 %v628
    %2882 = vmatpush1.msra.mxu0 %v627
    %2883 = vmatprep.subr.mxu0 %v630
    %2884 = vmatpush1.msra.mxu0 %v629
    %2885 = vmatprep.subr.mxu0 %v632
    %2886 = vmatpush1.msra.mxu0 %v631
    %2887 = vmatprep.subr.mxu0 %v634
    %2888 = vmatpush1.msra.mxu0 %v633
    %2889 = vmatprep.subr.mxu0 %v636
    %2890 = vmatpush1.msra.mxu0 %v635
    %2891 = vmatprep.subr.mxu0 %v638
    %2892 = vmatpush1.msra.mxu0 %v637
    %2893 = vmatprep.subr.mxu0 %v640
    %2894 = vmatpush1.msra.mxu0 %v639
    %2895 = vmatprep.subr.mxu0 %v642
    %2896 = vmatpush1.msra.mxu0 %v641
    %2897 = vmatprep.subr.mxu0 %v644
    %2898 = vmatpush1.msra.mxu0 %v643
    %2899 = vmatprep.subr.mxu0 %v646
    %2900 = vmatpush1.msra.mxu0 %v645
    %2901 = vmatprep.subr.mxu0 %v648
    %2902 = vmatpush1.msra.mxu0 %v647
    %2903 = vmatprep.subr.mxu0 %v650
    %2904 = vmatpush1.msra.mxu0 %v649
    %2905 = vmatprep.subr.mxu0 %v652
    %2906 = vmatpush1.msra.mxu0 %v651
    %2907 = vmatprep.subr.mxu0 %v654
    %2908 = vmatpush1.msra.mxu0 %v653
    %2909 = vmatprep.subr.mxu0 %v656
    %2910 = vmatpush1.msra.mxu0 %v655
    %2911 = vmatprep.subr.mxu0 %v658
    %2912 = vmatpush1.msra.mxu0 %v657
    %2913 = vmatprep.subr.mxu0 %v660
    %2914 = vmatpush1.msra.mxu0 %v659
    %2915 = vmatprep.subr.mxu0 %v662
    %2916 = vmatpush1.msra.mxu0 %v661
    %2917 = vmatprep.subr.mxu0 %v664
    %2918 = vmatpush1.msra.mxu0 %v663
    %2919 = vmatprep.subr.mxu0 %v666
    %2920 = vmatpush1.msra.mxu0 %v665
    %2921 = vmatprep.subr.mxu0 %v668
    %2922 = vmatpush1.msra.mxu0 %v667
    %2923 = vmatprep.subr.mxu0 %v670
    %2924 = vmatpush1.msra.mxu0 %v669
    %2925 = vmatprep.subr.mxu0 %v672
    %2926 = vmatpush1.msra.mxu0 %v671
    %2927 = vmatprep.subr.mxu0 %v674
    %2928 = vmatpush1.msra.mxu0 %v673
    %2929 = vmatprep.subr.mxu0 %v676
    %2930 = vmatpush1.msra.mxu0 %v675
    %2931 = vmatprep.mubr.f32.mxu0 %v2866
    %2932 = vmatmul.mubr.f32.gmra.mrb[0].mxu0 %v2857
    %v2933 = vpop.f32.mrb[0].mxu0
    %v2934 = vadd.f32 0.0, %v2933
    %v2935 = vpop.f32.mrb[0].mxu0
    %v2936 = vadd.f32 0.0, %v2935
    %2937 = vdwg.mxu0
    %v2938 = vmul.f32 %v2841, %v2819
    %v2939 = vmul.f32 %v2842, %v2821
    %v2940 = vmul.f32 %v2843, %v2823
    %v2941 = vmul.f32 %v2844, %v2825
    %v2942 = vmul.f32 %v2845, %v2829
    %v2943 = vmul.f32 %v2846, %v2831
    %v2944 = vmul.f32 %v2847, %v2833
    %v2945 = vmul.f32 %v2848, %v2835
    %v2946 = vadd.f32 %v2938, %v2940
    %v2947 = vadd.f32 %v2946, %v2942
    %v2948 = vadd.f32 %v2947, %v2944
    %v2949 = vrot.slane %v2948, 4
    %v2950 = vadd.f32 %v2948, %v2949
    %v2951 = vrot.slane %v2950, 2
    %v2952 = vadd.f32 %v2950, %v2951
    %v2953 = vrot.slane %v2952, 1
    %v2954 = vadd.f32 %v2952, %v2953
    %v2955 = vadd.f32 %v2939, %v2941
    %v2956 = vadd.f32 %v2955, %v2943
    %v2957 = vadd.f32 %v2956, %v2945
    %v2958 = vrot.slane %v2957, 4
    %v2959 = vadd.f32 %v2957, %v2958
    %v2960 = vrot.slane %v2959, 2
    %v2961 = vadd.f32 %v2959, %v2960
    %v2962 = vrot.slane %v2961, 1
    %v2963 = vadd.f32 %v2961, %v2962
    %2964 = vmatprep.subr.mxu0 %v614
    %2965 = vmatpush1.msra.mxu0 %v613
    %2966 = vmatprep.subr.mxu0 %v616
    %2967 = vmatpush1.msra.mxu0 %v615
    %2968 = vmatprep.subr.mxu0 %v618
    %2969 = vmatpush1.msra.mxu0 %v617
    %2970 = vmatprep.subr.mxu0 %v620
    %2971 = vmatpush1.msra.mxu0 %v619
    %2972 = vmatprep.subr.mxu0 %v622
    %2973 = vmatpush1.msra.mxu0 %v621
    %2974 = vmatprep.subr.mxu0 %v624
    %2975 = vmatpush1.msra.mxu0 %v623
    %2976 = vmatprep.subr.mxu0 %v626
    %2977 = vmatpush1.msra.mxu0 %v625
    %2978 = vmatprep.subr.mxu0 %v628
    %2979 = vmatpush1.msra.mxu0 %v627
    %2980 = vmatprep.subr.mxu0 %v630
    %2981 = vmatpush1.msra.mxu0 %v629
    %2982 = vmatprep.subr.mxu0 %v632
    %2983 = vmatpush1.msra.mxu0 %v631
    %2984 = vmatprep.subr.mxu0 %v634
    %2985 = vmatpush1.msra.mxu0 %v633
    %2986 = vmatprep.subr.mxu0 %v636
    %2987 = vmatpush1.msra.mxu0 %v635
    %2988 = vmatprep.subr.mxu0 %v638
    %2989 = vmatpush1.msra.mxu0 %v637
    %2990 = vmatprep.subr.mxu0 %v640
    %2991 = vmatpush1.msra.mxu0 %v639
    %2992 = vmatprep.subr.mxu0 %v642
    %2993 = vmatpush1.msra.mxu0 %v641
    %2994 = vmatprep.subr.mxu0 %v644
    %2995 = vmatpush1.msra.mxu0 %v643
    %2996 = vmatprep.subr.mxu0 %v646
    %2997 = vmatpush1.msra.mxu0 %v645
    %2998 = vmatprep.subr.mxu0 %v648
    %2999 = vmatpush1.msra.mxu0 %v647
    %3000 = vmatprep.subr.mxu0 %v650
    %3001 = vmatpush1.msra.mxu0 %v649
    %3002 = vmatprep.subr.mxu0 %v652
    %3003 = vmatpush1.msra.mxu0 %v651
    %3004 = vmatprep.subr.mxu0 %v654
    %3005 = vmatpush1.msra.mxu0 %v653
    %3006 = vmatprep.subr.mxu0 %v656
    %3007 = vmatpush1.msra.mxu0 %v655
    %3008 = vmatprep.subr.mxu0 %v658
    %3009 = vmatpush1.msra.mxu0 %v657
    %3010 = vmatprep.subr.mxu0 %v660
    %3011 = vmatpush1.msra.mxu0 %v659
    %3012 = vmatprep.subr.mxu0 %v662
    %3013 = vmatpush1.msra.mxu0 %v661
    %3014 = vmatprep.subr.mxu0 %v664
    %3015 = vmatpush1.msra.mxu0 %v663
    %3016 = vmatprep.subr.mxu0 %v666
    %3017 = vmatpush1.msra.mxu0 %v665
    %3018 = vmatprep.subr.mxu0 %v668
    %3019 = vmatpush1.msra.mxu0 %v667
    %3020 = vmatprep.subr.mxu0 %v670
    %3021 = vmatpush1.msra.mxu0 %v669
    %3022 = vmatprep.subr.mxu0 %v672
    %3023 = vmatpush1.msra.mxu0 %v671
    %3024 = vmatprep.subr.mxu0 %v674
    %3025 = vmatpush1.msra.mxu0 %v673
    %3026 = vmatprep.subr.mxu0 %v676
    %3027 = vmatpush1.msra.mxu0 %v675
    %3028 = vmatprep.mubr.f32.mxu0 %v2963
    %3029 = vmatmul.mubr.f32.gmra.mrb[0].mxu0 %v2954
    %v3030 = vpop.f32.mrb[0].mxu0
    %v3031 = vadd.f32 0.0, %v3030
    %v3032 = vpop.f32.mrb[0].mxu0
    %v3033 = vadd.f32 0.0, %v3032
    %3034 = vdwg.mxu0
    %v3035 = vmul.f32 %v2934, %v2934
    %v3036 = vmul.f32 %v2936, %v2936
    %v3037 = vsub.f32 %v3031, %v3035
    %v3038 = vsub.f32 %v3033, %v3036
    %v3039 = vadd.f32 %v3037, 1e-05
    %v3040 = vadd.f32 %v3038, 1e-05
    %v3041 = vrsqrt.pop %v3039
    %v3042 = vrsqrt.pop %v3040
    %v3045 = vcombine.low %v3041, %v3042
    %v3047 = vunpack.c.l.s4 1966171168
    %v3048 = vunpack.c.0.s8 %v3047
    %v3049 = vlaneseq
    %v3050 = vshrl.u32 %v3049, 7
    %v3051 = vsub.s32 %v3048, %v3050
    %v3052 = vrot.slane %v3045, %v3051
    %v3054 = vunpack.c.l.s4 1966171168
    %v3055 = vunpack.c.0.s8 %v3054
    %v3056 = vlaneseq
    %v3057 = vshrl.u32 %v3056, 7
    %v3058 = vsub.s32 %v3055, %v3057
    %v3059 = vrot.slane %v3052, %v3058
    %v3061 = vmul.f32 %v2838, %v3059
    %v3063 = vlaneseq
    %v3064 = vshrl.u32 %v3063, 7
    %v3065 = vsub.s32 0, %v3064
    %v3066 = vrot.slane %v3061, %v3065
    %v3067 = vlaneseq
    %v3068 = vshrl.u32 %v3067, 7
    %v3069 = vsub.s32 1, %v3068
    %v3070 = vrot.slane %v3061, %v3069
    %v3073 = vmul.f32 %v2934, %v3066
    %v3074 = vmul.f32 %v2936, %v3070
    %v3077 = vcombine.low %v3073, %v3074
    %v3079 = vunpack.c.l.s4 1966171168
    %v3080 = vunpack.c.0.s8 %v3079
    %v3081 = vlaneseq
    %v3082 = vshrl.u32 %v3081, 7
    %v3083 = vsub.s32 %v3080, %v3082
    %v3084 = vrot.slane %v3077, %v3083
    %v3086 = vunpack.c.l.s4 1966171168
    %v3087 = vunpack.c.0.s8 %v3086
    %v3088 = vlaneseq
    %v3089 = vshrl.u32 %v3088, 7
    %v3090 = vsub.s32 %v3087, %v3089
    %v3091 = vrot.slane %v3084, %v3090
    %v3093 = vsub.f32 %v2840, %v3091
    %v3094 = vmul.f32 %v2819, %v3066
    %v3095 = vmul.f32 %v2821, %v3070
    %v3096 = vmul.f32 %v2823, %v3066
    %v3097 = vmul.f32 %v2825, %v3070
    %v3098 = vmul.f32 %v2829, %v3066
    %v3099 = vmul.f32 %v2831, %v3070
    %v3100 = vmul.f32 %v2833, %v3066
    %v3101 = vmul.f32 %v2835, %v3070
    %v3103 = vlaneseq
    %v3104 = vshrl.u32 %v3103, 7
    %v3105 = vsub.s32 0, %v3104
    %v3106 = vrot.slane %v3093, %v3105
    %v3107 = vlaneseq
    %v3108 = vshrl.u32 %v3107, 7
    %v3109 = vsub.s32 1, %v3108
    %v3110 = vrot.slane %v3093, %v3109
    %v3113 = vadd.f32 %v3094, %v3106
    %v3114 = vadd.f32 %v3095, %v3110
    %v3115 = vadd.f32 %v3096, %v3106
    %v3116 = vadd.f32 %v3097, %v3110
    %v3117 = vadd.f32 %v3098, %v3106
    %v3118 = vadd.f32 %v3099, %v3110
    %v3119 = vadd.f32 %v3100, %v3106
    %v3120 = vadd.f32 %v3101, %v3110
    %v3121 = vadd.f32 %v3113, %v712
    %v3122 = vadd.f32 %v3114, %v715
    %v3123 = vadd.f32 %v3115, %v717
    %v3124 = vadd.f32 %v3116, %v719
    %v3125 = vadd.f32 %v3117, %v721
    %v3126 = vadd.f32 %v3118, %v723
    %v3127 = vadd.f32 %v3119, %v725
    %v3128 = vadd.f32 %v3120, %v727
    %v3129 = vmax.f32 %v3121, 0.0
    %v3130 = vmax.f32 %v3122, 0.0
    %v3131 = vmax.f32 %v3123, 0.0
    %v3132 = vmax.f32 %v3124, 0.0
    %v3133 = vmax.f32 %v3125, 0.0
    %v3134 = vmax.f32 %v3126, 0.0
    %v3135 = vmax.f32 %v3127, 0.0
    %v3136 = vmax.f32 %v3128, 0.0
    %3137 = vst [vmem:[%s4] sm:$0xff] %v3129
    %3138 = vst [vmem:[%s4 + $0x8] sm:$0xff] %v3130
    %3139 = vst [vmem:[%s4 + $0x10] sm:$0xff] %v3131
    %3140 = vst [vmem:[%s4 + $0x18] sm:$0xff] %v3132
    %3141 = vst [vmem:[%s4 + $0x20] sm:$0xff] %v3133
    %3142 = vst [vmem:[%s4 + $0x28] sm:$0xff] %v3134
    %3143 = vst [vmem:[%s4 + $0x30] sm:$0xff] %v3135
    %3144 = vst [vmem:[%s4 + $0x38] sm:$0xff] %v3136
    // Predicated region
    $region26: #{resblock_pallas.1} parent=1 // pred_check
      _
    $region27: #{resblock_pallas.1} parent=1 // pred_check_branch
      %3146 = sbr.rel (0) target = $region29
    $region28: #{resblock_pallas.1} parent=1 // pred_region
      _
    $region29: #{resblock_pallas.1} parent=1 // pred_fallthru
      _
    // Predicated region
    $region30: #{resblock_pallas.1} parent=1 // pred_check
      _
    $region31: #{resblock_pallas.1} parent=1 // pred_check_branch
      %3148 = sbr.rel (0) target = $region33
    $region32: #{resblock_pallas.1} parent=1 // pred_region
      _
    $region33: #{resblock_pallas.1} parent=1 // pred_fallthru
      _
    %3149 = vsyncpa [#allocation4], 1
    %3150 = vsyncpa [#allocation6], 1

</llo_original>
